<compile_context>
chip_gen: v7x
topology: tpu7x:2x2x1
jax: 0.10.0
libtpu: 0.0.40
codegen_flags: <defaults>
</compile_context>

<pallas_src>
import jax
import jax.numpy as jnp
from jax.experimental import pallas as pl
from jax.experimental.pallas import tpu as pltpu

LANE = 128             # vreg lane width: last dims padded to a multiple of this
BF16_ROWS = 16         # bf16 sublane packing: one bf16 vreg holds [16, 128]
MAX_BLOCK_BATCH = 512  # sweepable batch-tile cap (review: 512-1024)

_ACTIVATIONS = {
    "tanh": jnp.tanh,
    "relu": lambda v: jnp.maximum(v, 0.0),
    "gelu": jax.nn.gelu,
    "sigmoid": jax.nn.sigmoid,
}
_TRANSCENDENTAL_ACTS = ("tanh", "gelu", "sigmoid")


def _round_up(n, m):
    return ((n + m - 1) // m) * m


def _make_nomad_kernel(num_layers, act_fn):
    """Fused MLP kernel for a static number of Linear layers and a static activation."""

    def kernel(x_ref, *refs):
        # refs = (w0, b0, w1, b1, ..., w_{L-1}, b_{L-1}, out_ref)
        out_ref = refs[-1]
        params = refs[:-1]
        h = x_ref[...]                                   # bf16 (block_batch, in_pad)
        for i in range(num_layers):
            w = params[2 * i][...]                       # bf16 (in_pad, out_pad)
            b = params[2 * i + 1][...]                   # f32  (1, out_pad)
            acc = jnp.dot(h, w, preferred_element_type=jnp.float32) + b
            if i < num_layers - 1:
                # activation in f32 (EUP/VPU), re-cast to bf16 only for the next MXU matmul
                h = act_fn(acc).astype(jnp.bfloat16)
            else:
                h = acc                                  # final layer: no activation
        out_ref[...] = h.astype(out_ref.dtype)           # bf16 store (lane-dense)

    return kernel


def prepare_nomad_params(weights, biases):
    """One-time pad + cast of parameters (hoisted out of the per-forward path).

    weights: list of (in_i, out_i) arrays (already transposed vs torch's (out, in))
    biases:  list of (out_i,) or (1, out_i) arrays
    """
    num_layers = len(weights)
    assert len(biases) == num_layers
    in_dim = weights[0].shape[0]
    dims = [in_dim] + [w.shape[1] for w in weights]
    pdims = tuple(_round_up(d, LANE) for d in dims)

    params = []
    for li, (w, b) in enumerate(zip(weights, biases)):
        ip, op = pdims[li], pdims[li + 1]
        w_p = jnp.pad(w, ((0, ip - w.shape[0]), (0, op - w.shape[1]))).astype(jnp.bfloat16)
        b2 = jnp.reshape(b, (1, -1))
        b_p = jnp.pad(b2, ((0, 0), (0, op - b2.shape[1]))).astype(jnp.float32)
        params += [w_p, b_p]

    return {
        "params": tuple(params),
        "pdims": pdims,
        "in_dim": in_dim,
        "out_dim": dims[-1],
        "num_layers": num_layers,
    }


def nomad_forward_prepared(x, prep, *, activation="tanh", block_batch=None):
    """Run the fused NOMAD MLP as a single pallas_call, tiled over the batch only."""
    params = prep["params"]
    pdims = prep["pdims"]
    num_layers = prep["num_layers"]
    out_dim = prep["out_dim"]

    B, in_dim = x.shape
    assert in_dim == prep["in_dim"], "input feature dim mismatch with prepared params"

    # ---- batch tile heuristic (review feedback) --------------------------------------
    if block_batch is None:
        b16 = _round_up(B, BF16_ROWS)
        if b16 <= MAX_BLOCK_BATCH:
            block_batch = b16                       # single grid step: no per-step overhead
        else:
            # large batch: big tiles, but >=4 steps (>=2 per v7x TC) so the BlockSpec
            # pipeline can overlap the x-load / out-store DMAs with compute.
            block_batch = min(MAX_BLOCK_BATCH, _round_up(pl.cdiv(B, 4), BF16_ROWS))
    block_batch = _round_up(block_batch, BF16_ROWS)
    Bp = _round_up(B, block_batch)
    grid = (Bp // block_batch,)

    # ---- VMEM budget / limit ----------------------------------------------------------
    w_bytes = sum(pdims[i] * pdims[i + 1] * 2 for i in range(num_layers))    # bf16 weights
    b_bytes = sum(pdims[i + 1] * 4 for i in range(num_layers))               # f32 biases
    io_bytes = 2 * block_batch * (pdims[0] + pdims[-1]) * 2                  # x/out, 2 bufs, bf16
    act_bytes = block_batch * max(pdims) * 6                                 # f32 acc + bf16 h
    vmem_est = 2 * (w_bytes + b_bytes) + io_bytes + act_bytes                # conservative
    if vmem_est > (44 << 20):
        raise ValueError(
            "NOMAD params too large for the whole-resident-weights strategy on v7x/v5e; "
            "a weight-tiled path is required (see TODO(synk) at top of file).")
    vmem_limit = int(min(48 << 20, max(16 << 20, 2 * vmem_est)))

    # ---- cost estimate (helps XLA schedule around the custom call) --------------------
    flops = 2 * Bp * sum(pdims[i] * pdims[i + 1] for i in range(num_layers))
    transcendentals = Bp * sum(pdims[1:num_layers]) if activation in _TRANSCENDENTAL_ACTS else 0
    bytes_accessed = Bp * pdims[0] * 2 + w_bytes + b_bytes + Bp * pdims[-1] * 2
    cost = pl.CostEstimate(flops=int(flops), transcendentals=int(transcendentals),
                           bytes_accessed=int(bytes_accessed))

    # ---- pad the activations once per call (batch + lanes) ----------------------------
    x_p = jnp.pad(x, ((0, Bp - B), (0, pdims[0] - in_dim))).astype(jnp.bfloat16)

    kernel = _make_nomad_kernel(num_layers, _ACTIVATIONS[activation])
    x_spec = pl.BlockSpec((block_batch, pdims[0]), lambda i: (i, 0))
    out_spec = pl.BlockSpec((block_batch, pdims[-1]), lambda i: (i, 0))

    def _run(buffered_weights):
        pm = {"pipeline_mode": pl.Buffered(1)} if buffered_weights else {}
        in_specs = [x_spec]
        for li in range(num_layers):
            ip, op = pdims[li], pdims[li + 1]
            in_specs.append(pl.BlockSpec((ip, op), lambda i: (0, 0), **pm))  # resident weight
            in_specs.append(pl.BlockSpec((1, op), lambda i: (0, 0), **pm))   # resident bias
        return pl.pallas_call(
            kernel,
            out_shape=jax.ShapeDtypeStruct((Bp, pdims[-1]), jnp.bfloat16),
            grid_spec=pltpu.PrefetchScalarGridSpec(
                num_scalar_prefetch=0,
                grid=grid,
                in_specs=in_specs,
                out_specs=out_spec,
            ),
            compiler_params=pltpu.CompilerParams(
                dimension_semantics=("parallel",),
                vmem_limit_bytes=vmem_limit,
            ),
            cost_estimate=cost,
        )(x_p, *params)

    try:
        # Weight/bias block indices never change -> single-buffer them (halves resident VMEM).
        out_p = _run(True)
    except Exception:
        # Fallback for jax versions where Buffered(1) on a top-level BlockSpec is rejected.
        out_p = _run(False)

    # Strip batch + lane padding outside the kernel (stores inside stay lane-dense).
    return out_p[:B, :out_dim].astype(x.dtype)


def nomad_forward(x, weights, biases, *, activation="tanh", block_batch=None):
    """Convenience wrapper (prepares params every call). For repeated forwards, call
    prepare_nomad_params() once and use nomad_forward_prepared()."""
    return nomad_forward_prepared(x, prepare_nomad_params(weights, biases),
                                  activation=activation, block_batch=block_batch)


def nomad_reference(x, weights, biases, *, activation="tanh", match_bf16=False):
    """Pure-JAX reference matching the PyTorch forward.

    match_bf16=True mimics the kernel's bf16 MXU operands and bf16 output for a tight check.
    """
    act = _ACTIVATIONS[activation]
    if match_bf16:
        cast = lambda a: a.astype(jnp.bfloat16).astype(jnp.float32)
    else:
        cast = lambda a: a.astype(jnp.float32)
    h = x.astype(jnp.float32)
    for i, (w, b) in enumerate(zip(weights, biases)):
        h = jnp.dot(cast(h), cast(w)) + jnp.reshape(b, (1, -1)).astype(jnp.float32)
        if i < len(weights) - 1:
            h = act(h)
    if match_bf16:
        h = h.astype(jnp.bfloat16).astype(jnp.float32)
    return h.astype(x.dtype)


def init_nomad_params(key, input_dim, hidden_dim, output_dim, hidden_layers):
    """nn.Linear-style U(-1/sqrt(fan_in), +1/sqrt(fan_in)) init.

    Layers match the module: [in->hid] + hidden_layers*[hid->hid] + [hid->out].
    Weights returned as (in, out) (transposed vs torch's (out, in)); biases as (1, out).
    """
    dims = [(input_dim, hidden_dim)]
    dims += [(hidden_dim, hidden_dim)] * hidden_layers
    dims += [(hidden_dim, output_dim)]

    weights, biases = [], []
    for (fan_in, fan_out) in dims:
        key, kw, kb = jax.random.split(key, 3)
        bound = 1.0 / (fan_in ** 0.5)
        weights.append(jax.random.uniform(kw, (fan_in, fan_out), jnp.float32, -bound, bound))
        biases.append(jax.random.uniform(kb, (1, fan_out), jnp.float32, -bound, bound))
    return weights, biases


if __name__ == "__main__":
    # Small, module-consistent shapes.
    batch = 16
    input_dim = 16
    hidden_dim = 32
    output_dim = 8
    hidden_layers = 2  # -> 4 Linear layers total

    key = jax.random.PRNGKey(0)
    key, kx = jax.random.split(key)
    x = jax.random.normal(kx, (batch, input_dim), jnp.float32)

    weights, biases = init_nomad_params(key, input_dim, hidden_dim, output_dim, hidden_layers)

    # Pad/cast parameters ONCE (hoisted out of the per-forward path).
    prep = prepare_nomad_params(weights, biases)

    for act in ("tanh", "sigmoid"):   # sigmoid exercises the non-zero-preserving padding path
        out = nomad_forward_prepared(x, prep, activation=act)
        out = jax.block_until_ready(out)
        assert out.shape == (batch, output_dim)

        # Tight check vs a reference that mimics the kernel's bf16 MXU operands / bf16 output.
        ref_bf16 = nomad_reference(x, weights, biases, activation=act, match_bf16=True)
        assert jnp.allclose(out, ref_bf16, atol=2e-2, rtol=2e-2), \
            f"{act}: mismatch vs bf16-matched reference"

        # Loose sanity check vs the full-f32 (PyTorch-equivalent) reference.
        ref_f32 = nomad_reference(x, weights, biases, activation=act, match_bf16=False)
        assert jnp.allclose(out, ref_f32, atol=1e-1, rtol=1e-1), \
            f"{act}: mismatch vs f32 reference"

    print("KERNEL_OK")
</pallas_src>

<mosaic_0001>
module attributes {stable_mosaic.version = 11 : i64} {
  func.func @kernel(%arg0: i32, %arg1: memref<16x128xbf16, #tpu.memory_space<vmem>>, %arg2: memref<128x128xbf16, #tpu.memory_space<vmem>>, %arg3: memref<1x128xf32, #tpu.memory_space<vmem>>, %arg4: memref<128x128xbf16, #tpu.memory_space<vmem>>, %arg5: memref<1x128xf32, #tpu.memory_space<vmem>>, %arg6: memref<128x128xbf16, #tpu.memory_space<vmem>>, %arg7: memref<1x128xf32, #tpu.memory_space<vmem>>, %arg8: memref<128x128xbf16, #tpu.memory_space<vmem>>, %arg9: memref<1x128xf32, #tpu.memory_space<vmem>>, %arg10: memref<16x128xbf16, #tpu.memory_space<vmem>>) attributes {dimension_semantics = [#tpu.dimension_semantics<parallel>], iteration_bounds = array<i64: 1>, scalar_prefetch = 0 : i64, scratch_operands = 0 : i64, tpu.core_type = #tpu.core_type<tc>, window_params = [{transform_indices = @transform_0, window_bounds = array<i64: 16, 128>}, {pipeline_mode = #tpu.pipeline_mode<synchronous>, transform_indices = @transform_1, window_bounds = array<i64: 128, 128>}, {pipeline_mode = #tpu.pipeline_mode<synchronous>, transform_indices = @transform_2, window_bounds = array<i64: 1, 128>}, {pipeline_mode = #tpu.pipeline_mode<synchronous>, transform_indices = @transform_3, window_bounds = array<i64: 128, 128>}, {pipeline_mode = #tpu.pipeline_mode<synchronous>, transform_indices = @transform_4, window_bounds = array<i64: 1, 128>}, {pipeline_mode = #tpu.pipeline_mode<synchronous>, transform_indices = @transform_5, window_bounds = array<i64: 128, 128>}, {pipeline_mode = #tpu.pipeline_mode<synchronous>, transform_indices = @transform_6, window_bounds = array<i64: 1, 128>}, {pipeline_mode = #tpu.pipeline_mode<synchronous>, transform_indices = @transform_7, window_bounds = array<i64: 128, 128>}, {pipeline_mode = #tpu.pipeline_mode<synchronous>, transform_indices = @transform_8, window_bounds = array<i64: 1, 128>}, {transform_indices = @transform_9, window_bounds = array<i64: 16, 128>}]} {
    %c0 = arith.constant 0 : index
    %c0_0 = arith.constant 0 : index
    %0 = vector.load %arg1[%c0, %c0_0] : memref<16x128xbf16, #tpu.memory_space<vmem>>, vector<16x128xbf16>
    %c0_1 = arith.constant 0 : index
    %c0_2 = arith.constant 0 : index
    %1 = vector.load %arg2[%c0_1, %c0_2] : memref<128x128xbf16, #tpu.memory_space<vmem>>, vector<128x128xbf16>
    %c0_3 = arith.constant 0 : index
    %c0_4 = arith.constant 0 : index
    %2 = vector.load %arg3[%c0_3, %c0_4] : memref<1x128xf32, #tpu.memory_space<vmem>>, vector<1x128xf32>
    %cst = arith.constant dense<0.000000e+00> : vector<16x128xf32>
    %3 = tpu.matmul %0, %1, %cst {dimension_numbers = #tpu.dot_dimension_numbers<[1], [0], [0], [1], [0, 0, 1, 1], [], []>} : vector<16x128xbf16>, vector<128x128xbf16>, vector<16x128xf32> -> vector<16x128xf32>
    %4 = vector.broadcast %2 : vector<1x128xf32> to vector<16x128xf32>
    %5 = arith.addf %3, %4 : vector<16x128xf32>
    %6 = math.tanh %5 : vector<16x128xf32>
    %7 = arith.truncf %6 : vector<16x128xf32> to vector<16x128xbf16>
    %c0_5 = arith.constant 0 : index
    %c0_6 = arith.constant 0 : index
    %8 = vector.load %arg4[%c0_5, %c0_6] : memref<128x128xbf16, #tpu.memory_space<vmem>>, vector<128x128xbf16>
    %c0_7 = arith.constant 0 : index
    %c0_8 = arith.constant 0 : index
    %9 = vector.load %arg5[%c0_7, %c0_8] : memref<1x128xf32, #tpu.memory_space<vmem>>, vector<1x128xf32>
    %cst_9 = arith.constant dense<0.000000e+00> : vector<16x128xf32>
    %10 = tpu.matmul %7, %8, %cst_9 {dimension_numbers = #tpu.dot_dimension_numbers<[1], [0], [0], [1], [0, 0, 1, 1], [], []>} : vector<16x128xbf16>, vector<128x128xbf16>, vector<16x128xf32> -> vector<16x128xf32>
    %11 = vector.broadcast %9 : vector<1x128xf32> to vector<16x128xf32>
    %12 = arith.addf %10, %11 : vector<16x128xf32>
    %13 = math.tanh %12 : vector<16x128xf32>
    %14 = arith.truncf %13 : vector<16x128xf32> to vector<16x128xbf16>
    %c0_10 = arith.constant 0 : index
    %c0_11 = arith.constant 0 : index
    %15 = vector.load %arg6[%c0_10, %c0_11] : memref<128x128xbf16, #tpu.memory_space<vmem>>, vector<128x128xbf16>
    %c0_12 = arith.constant 0 : index
    %c0_13 = arith.constant 0 : index
    %16 = vector.load %arg7[%c0_12, %c0_13] : memref<1x128xf32, #tpu.memory_space<vmem>>, vector<1x128xf32>
    %cst_14 = arith.constant dense<0.000000e+00> : vector<16x128xf32>
    %17 = tpu.matmul %14, %15, %cst_14 {dimension_numbers = #tpu.dot_dimension_numbers<[1], [0], [0], [1], [0, 0, 1, 1], [], []>} : vector<16x128xbf16>, vector<128x128xbf16>, vector<16x128xf32> -> vector<16x128xf32>
    %18 = vector.broadcast %16 : vector<1x128xf32> to vector<16x128xf32>
    %19 = arith.addf %17, %18 : vector<16x128xf32>
    %20 = math.tanh %19 : vector<16x128xf32>
    %21 = arith.truncf %20 : vector<16x128xf32> to vector<16x128xbf16>
    %c0_15 = arith.constant 0 : index
    %c0_16 = arith.constant 0 : index
    %22 = vector.load %arg8[%c0_15, %c0_16] : memref<128x128xbf16, #tpu.memory_space<vmem>>, vector<128x128xbf16>
    %c0_17 = arith.constant 0 : index
    %c0_18 = arith.constant 0 : index
    %23 = vector.load %arg9[%c0_17, %c0_18] : memref<1x128xf32, #tpu.memory_space<vmem>>, vector<1x128xf32>
    %cst_19 = arith.constant dense<0.000000e+00> : vector<16x128xf32>
    %24 = tpu.matmul %21, %22, %cst_19 {dimension_numbers = #tpu.dot_dimension_numbers<[1], [0], [0], [1], [0, 0, 1, 1], [], []>} : vector<16x128xbf16>, vector<128x128xbf16>, vector<16x128xf32> -> vector<16x128xf32>
    %25 = vector.broadcast %23 : vector<1x128xf32> to vector<16x128xf32>
    %26 = arith.addf %24, %25 : vector<16x128xf32>
    %27 = arith.truncf %26 : vector<16x128xf32> to vector<16x128xbf16>
    %c0_20 = arith.constant 0 : index
    %c0_21 = arith.constant 0 : index
    %28 = vector.load %arg10[%c0_20, %c0_21] : memref<16x128xbf16, #tpu.memory_space<vmem>>, vector<16x128xbf16>
    tpu.vector_store %arg10[%c0_20, %c0_21], %27 {strides = array<i32>} : memref<16x128xbf16, #tpu.memory_space<vmem>>, vector<16x128xbf16>,
    return
  }
  func.func @transform_0(%arg0: i32) -> (i32, i32) {
    %c0_i32 = arith.constant 0 : i32
    %c0_i32_0 = arith.constant 0 : i32
    return %arg0, %c0_i32 : i32, i32
  }
  func.func @transform_1(%arg0: i32) -> (i32, i32) {
    %c0_i32 = arith.constant 0 : i32
    %c0_i32_0 = arith.constant 0 : i32
    %c0_i32_1 = arith.constant 0 : i32
    return %c0_i32, %c0_i32_0 : i32, i32
  }
  func.func @transform_2(%arg0: i32) -> (i32, i32) {
    %c0_i32 = arith.constant 0 : i32
    %c0_i32_0 = arith.constant 0 : i32
    %c0_i32_1 = arith.constant 0 : i32
    return %c0_i32, %c0_i32_0 : i32, i32
  }
  func.func @transform_3(%arg0: i32) -> (i32, i32) {
    %c0_i32 = arith.constant 0 : i32
    %c0_i32_0 = arith.constant 0 : i32
    %c0_i32_1 = arith.constant 0 : i32
    return %c0_i32, %c0_i32_0 : i32, i32
  }
  func.func @transform_4(%arg0: i32) -> (i32, i32) {
    %c0_i32 = arith.constant 0 : i32
    %c0_i32_0 = arith.constant 0 : i32
    %c0_i32_1 = arith.constant 0 : i32
    return %c0_i32, %c0_i32_0 : i32, i32
  }
  func.func @transform_5(%arg0: i32) -> (i32, i32) {
    %c0_i32 = arith.constant 0 : i32
    %c0_i32_0 = arith.constant 0 : i32
    %c0_i32_1 = arith.constant 0 : i32
    return %c0_i32, %c0_i32_0 : i32, i32
  }
  func.func @transform_6(%arg0: i32) -> (i32, i32) {
    %c0_i32 = arith.constant 0 : i32
    %c0_i32_0 = arith.constant 0 : i32
    %c0_i32_1 = arith.constant 0 : i32
    return %c0_i32, %c0_i32_0 : i32, i32
  }
  func.func @transform_7(%arg0: i32) -> (i32, i32) {
    %c0_i32 = arith.constant 0 : i32
    %c0_i32_0 = arith.constant 0 : i32
    %c0_i32_1 = arith.constant 0 : i32
    return %c0_i32, %c0_i32_0 : i32, i32
  }
  func.func @transform_8(%arg0: i32) -> (i32, i32) {
    %c0_i32 = arith.constant 0 : i32
    %c0_i32_0 = arith.constant 0 : i32
    %c0_i32_1 = arith.constant 0 : i32
    return %c0_i32, %c0_i32_0 : i32, i32
  }
  func.func @transform_9(%arg0: i32) -> (i32, i32) {
    %c0_i32 = arith.constant 0 : i32
    %c0_i32_0 = arith.constant 0 : i32
    return %arg0, %c0_i32 : i32, i32
  }
}

module attributes {stable_mosaic.version = 11 : i64} {
  func.func @kernel(%arg0: i32, %arg1: memref<16x128xbf16, #tpu.memory_space<vmem>>, %arg2: memref<128x128xbf16, #tpu.memory_space<vmem>>, %arg3: memref<1x128xf32, #tpu.memory_space<vmem>>, %arg4: memref<128x128xbf16, #tpu.memory_space<vmem>>, %arg5: memref<1x128xf32, #tpu.memory_space<vmem>>, %arg6: memref<128x128xbf16, #tpu.memory_space<vmem>>, %arg7: memref<1x128xf32, #tpu.memory_space<vmem>>, %arg8: memref<128x128xbf16, #tpu.memory_space<vmem>>, %arg9: memref<1x128xf32, #tpu.memory_space<vmem>>, %arg10: memref<16x128xbf16, #tpu.memory_space<vmem>>) attributes {dimension_semantics = [#tpu.dimension_semantics<parallel>], iteration_bounds = array<i64: 1>, scalar_prefetch = 0 : i64, scratch_operands = 0 : i64, tpu.core_type = #tpu.core_type<tc>, window_params = [{transform_indices = @transform_0, window_bounds = array<i64: 16, 128>}, {pipeline_mode = #tpu.pipeline_mode<synchronous>, transform_indices = @transform_1, window_bounds = array<i64: 128, 128>}, {pipeline_mode = #tpu.pipeline_mode<synchronous>, transform_indices = @transform_2, window_bounds = array<i64: 1, 128>}, {pipeline_mode = #tpu.pipeline_mode<synchronous>, transform_indices = @transform_3, window_bounds = array<i64: 128, 128>}, {pipeline_mode = #tpu.pipeline_mode<synchronous>, transform_indices = @transform_4, window_bounds = array<i64: 1, 128>}, {pipeline_mode = #tpu.pipeline_mode<synchronous>, transform_indices = @transform_5, window_bounds = array<i64: 128, 128>}, {pipeline_mode = #tpu.pipeline_mode<synchronous>, transform_indices = @transform_6, window_bounds = array<i64: 1, 128>}, {pipeline_mode = #tpu.pipeline_mode<synchronous>, transform_indices = @transform_7, window_bounds = array<i64: 128, 128>}, {pipeline_mode = #tpu.pipeline_mode<synchronous>, transform_indices = @transform_8, window_bounds = array<i64: 1, 128>}, {transform_indices = @transform_9, window_bounds = array<i64: 16, 128>}]} {
    %c0 = arith.constant 0 : index
    %c0_0 = arith.constant 0 : index
    %0 = vector.load %arg1[%c0, %c0_0] : memref<16x128xbf16, #tpu.memory_space<vmem>>, vector<16x128xbf16>
    %c0_1 = arith.constant 0 : index
    %c0_2 = arith.constant 0 : index
    %1 = vector.load %arg2[%c0_1, %c0_2] : memref<128x128xbf16, #tpu.memory_space<vmem>>, vector<128x128xbf16>
    %c0_3 = arith.constant 0 : index
    %c0_4 = arith.constant 0 : index
    %2 = vector.load %arg3[%c0_3, %c0_4] : memref<1x128xf32, #tpu.memory_space<vmem>>, vector<1x128xf32>
    %cst = arith.constant dense<0.000000e+00> : vector<16x128xf32>
    %3 = tpu.matmul %0, %1, %cst {dimension_numbers = #tpu.dot_dimension_numbers<[1], [0], [0], [1], [0, 0, 1, 1], [], []>} : vector<16x128xbf16>, vector<128x128xbf16>, vector<16x128xf32> -> vector<16x128xf32>
    %4 = vector.broadcast %2 : vector<1x128xf32> to vector<16x128xf32>
    %5 = arith.addf %3, %4 : vector<16x128xf32>
    %6 = math.tanh %5 : vector<16x128xf32>
    %7 = arith.truncf %6 : vector<16x128xf32> to vector<16x128xbf16>
    %c0_5 = arith.constant 0 : index
    %c0_6 = arith.constant 0 : index
    %8 = vector.load %arg4[%c0_5, %c0_6] : memref<128x128xbf16, #tpu.memory_space<vmem>>, vector<128x128xbf16>
    %c0_7 = arith.constant 0 : index
    %c0_8 = arith.constant 0 : index
    %9 = vector.load %arg5[%c0_7, %c0_8] : memref<1x128xf32, #tpu.memory_space<vmem>>, vector<1x128xf32>
    %cst_9 = arith.constant dense<0.000000e+00> : vector<16x128xf32>
    %10 = tpu.matmul %7, %8, %cst_9 {dimension_numbers = #tpu.dot_dimension_numbers<[1], [0], [0], [1], [0, 0, 1, 1], [], []>} : vector<16x128xbf16>, vector<128x128xbf16>, vector<16x128xf32> -> vector<16x128xf32>
    %11 = vector.broadcast %9 : vector<1x128xf32> to vector<16x128xf32>
    %12 = arith.addf %10, %11 : vector<16x128xf32>
    %13 = math.tanh %12 : vector<16x128xf32>
    %14 = arith.truncf %13 : vector<16x128xf32> to vector<16x128xbf16>
    %c0_10 = arith.constant 0 : index
    %c0_11 = arith.constant 0 : index
    %15 = vector.load %arg6[%c0_10, %c0_11] : memref<128x128xbf16, #tpu.memory_space<vmem>>, vector<128x128xbf16>
    %c0_12 = arith.constant 0 : index
    %c0_13 = arith.constant 0 : index
    %16 = vector.load %arg7[%c0_12, %c0_13] : memref<1x128xf32, #tpu.memory_space<vmem>>, vector<1x128xf32>
    %cst_14 = arith.constant dense<0.000000e+00> : vector<16x128xf32>
    %17 = tpu.matmul %14, %15, %cst_14 {dimension_numbers = #tpu.dot_dimension_numbers<[1], [0], [0], [1], [0, 0, 1, 1], [], []>} : vector<16x128xbf16>, vector<128x128xbf16>, vector<16x128xf32> -> vector<16x128xf32>
    %18 = vector.broadcast %16 : vector<1x128xf32> to vector<16x128xf32>
    %19 = arith.addf %17, %18 : vector<16x128xf32>
    %20 = math.tanh %19 : vector<16x128xf32>
    %21 = arith.truncf %20 : vector<16x128xf32> to vector<16x128xbf16>
    %c0_15 = arith.constant 0 : index
    %c0_16 = arith.constant 0 : index
    %22 = vector.load %arg8[%c0_15, %c0_16] : memref<128x128xbf16, #tpu.memory_space<vmem>>, vector<128x128xbf16>
    %c0_17 = arith.constant 0 : index
    %c0_18 = arith.constant 0 : index
    %23 = vector.load %arg9[%c0_17, %c0_18] : memref<1x128xf32, #tpu.memory_space<vmem>>, vector<1x128xf32>
    %cst_19 = arith.constant dense<0.000000e+00> : vector<16x128xf32>
    %24 = tpu.matmul %21, %22, %cst_19 {dimension_numbers = #tpu.dot_dimension_numbers<[1], [0], [0], [1], [0, 0, 1, 1], [], []>} : vector<16x128xbf16>, vector<128x128xbf16>, vector<16x128xf32> -> vector<16x128xf32>
    %25 = vector.broadcast %23 : vector<1x128xf32> to vector<16x128xf32>
    %26 = arith.addf %24, %25 : vector<16x128xf32>
    %27 = arith.truncf %26 : vector<16x128xf32> to vector<16x128xbf16>
    %c0_20 = arith.constant 0 : index
    %c0_21 = arith.constant 0 : index
    %28 = vector.load %arg10[%c0_20, %c0_21] : memref<16x128xbf16, #tpu.memory_space<vmem>>, vector<16x128xbf16>
    tpu.vector_store %arg10[%c0_20, %c0_21], %27 {strides = array<i32>} : memref<16x128xbf16, #tpu.memory_space<vmem>>, vector<16x128xbf16>,
    return
  }
  func.func @transform_0(%arg0: i32) -> (i32, i32) {
    %c0_i32 = arith.constant 0 : i32
    %c0_i32_0 = arith.constant 0 : i32
    return %arg0, %c0_i32 : i32, i32
  }
  func.func @transform_1(%arg0: i32) -> (i32, i32) {
    %c0_i32 = arith.constant 0 : i32
    %c0_i32_0 = arith.constant 0 : i32
    %c0_i32_1 = arith.constant 0 : i32
    return %c0_i32, %c0_i32_0 : i32, i32
  }
  func.func @transform_2(%arg0: i32) -> (i32, i32) {
    %c0_i32 = arith.constant 0 : i32
    %c0_i32_0 = arith.constant 0 : i32
    %c0_i32_1 = arith.constant 0 : i32
    return %c0_i32, %c0_i32_0 : i32, i32
  }
  func.func @transform_3(%arg0: i32) -> (i32, i32) {
    %c0_i32 = arith.constant 0 : i32
    %c0_i32_0 = arith.constant 0 : i32
    %c0_i32_1 = arith.constant 0 : i32
    return %c0_i32, %c0_i32_0 : i32, i32
  }
  func.func @transform_4(%arg0: i32) -> (i32, i32) {
    %c0_i32 = arith.constant 0 : i32
    %c0_i32_0 = arith.constant 0 : i32
    %c0_i32_1 = arith.constant 0 : i32
    return %c0_i32, %c0_i32_0 : i32, i32
  }
  func.func @transform_5(%arg0: i32) -> (i32, i32) {
    %c0_i32 = arith.constant 0 : i32
    %c0_i32_0 = arith.constant 0 : i32
    %c0_i32_1 = arith.constant 0 : i32
    return %c0_i32, %c0_i32_0 : i32, i32
  }
  func.func @transform_6(%arg0: i32) -> (i32, i32) {
    %c0_i32 = arith.constant 0 : i32
    %c0_i32_0 = arith.constant 0 : i32
    %c0_i32_1 = arith.constant 0 : i32
    return %c0_i32, %c0_i32_0 : i32, i32
  }
  func.func @transform_7(%arg0: i32) -> (i32, i32) {
    %c0_i32 = arith.constant 0 : i32
    %c0_i32_0 = arith.constant 0 : i32
    %c0_i32_1 = arith.constant 0 : i32
    return %c0_i32, %c0_i32_0 : i32, i32
  }
  func.func @transform_8(%arg0: i32) -> (i32, i32) {
    %c0_i32 = arith.constant 0 : i32
    %c0_i32_0 = arith.constant 0 : i32
    %c0_i32_1 = arith.constant 0 : i32
    return %c0_i32, %c0_i32_0 : i32, i32
  }
  func.func @transform_9(%arg0: i32) -> (i32, i32) {
    %c0_i32 = arith.constant 0 : i32
    %c0_i32_0 = arith.constant 0 : i32
    return %arg0, %c0_i32 : i32, i32
  }
}

</mosaic_0001>

<llo_original>
// kernel: tpu_custom_call.1
$region0: #{tpu_custom_call.1}
  #allocation0 [shape = 'u32[]', space=smem, size = 0x4, offset = 0x4, fixed_abs, tag = 'smem constant byte address 0x4 - core index']
  #allocation1 [shape = 'u32[144,128]{1,0:T(1,128)}', space=vmem, size = 0x12000, scoped, tag = 'internal scratch']
  %s0 = inlined_call_operand.hbm [shape: bf16[16,128], index: 0, kind: input, shape index: {}]
  %s1 = inlined_call_operand.hbm [shape: bf16[128,128], index: 1, kind: input, shape index: {}]
  %s2 = inlined_call_operand.vmem [shape: f32[1,128], index: 2, kind: input, shape index: {}]
  %s3 = inlined_call_operand.hbm [shape: bf16[128,128], index: 3, kind: input, shape index: {}]
  %s4 = inlined_call_operand.vmem [shape: f32[1,128], index: 4, kind: input, shape index: {}]
  %s5 = inlined_call_operand.hbm [shape: bf16[128,128], index: 5, kind: input, shape index: {}]
  %s6 = inlined_call_operand.vmem [shape: f32[1,128], index: 6, kind: input, shape index: {}]
  %s7 = inlined_call_operand.hbm [shape: bf16[128,128], index: 7, kind: input, shape index: {}]
  %s8 = inlined_call_operand.vmem [shape: f32[1,128], index: 8, kind: input, shape index: {}]
  %s9 = inlined_call_operand.hbm [shape: bf16[16,128], index: 9, kind: output, shape index: {}]
  %s10 = sld [smem:[#allocation0]]
  $region66: #{tpu_custom_call.1} parent=0
    _
  %s12 = ssub.s32 1, %s10
  %s13 = scalar_select 0, %s12, %s10
  $region1: #{tpu_custom_call.1} parent=0
    #allocation2 [shape = 'u8[4096]{0}', space=vmem, size = 0x1000, scoped, tag = 'input window, operand 0, single buffered']
    #allocation3 [shape = 's32[1]{0}', space=sflag, size = 0x4, scoped, tag = 'scoped memory for tpu_custom_call.1']
    #allocation4 [shape = 's32[1]{0}', space=sflag, size = 0x4, scoped, tag = 'scoped memory for tpu_custom_call.1']
    #allocation5 [shape = 'u8[32768]{0}', space=vmem, size = 0x8000, scoped, tag = 'input window, operand 1, single buffered']
    #allocation6 [shape = 's32[1]{0}', space=sflag, size = 0x4, scoped, tag = 'scoped memory for tpu_custom_call.1']
    #allocation7 [shape = 'u8[32768]{0}', space=vmem, size = 0x8000, scoped, tag = 'input window, operand 3, single buffered']
    #allocation8 [shape = 'u8[32768]{0}', space=vmem, size = 0x8000, scoped, tag = 'input window, operand 5, single buffered']
    #allocation9 [shape = 's32[1]{0}', space=sflag, size = 0x4, scoped, tag = 'scoped memory for tpu_custom_call.1']
    #allocation10 [shape = 'u8[32768]{0}', space=vmem, size = 0x8000, scoped, tag = 'input window, operand 7, single buffered']
    #allocation11 [shape = 'u8[4096]{0}', space=vmem, size = 0x1000, scoped, tag = 'output window, operand 0, single buffered']
    %14 = vsyncpa [#allocation3], 0
    %15 = vsyncpa [#allocation6], 0
    %16 = vsyncpa [#allocation9], 0
    %17 = vsyncpa [#allocation4], 0
    // Predicated region
    $region2: #{tpu_custom_call.1} parent=1 // pred_check
      _
    $region3: #{tpu_custom_call.1} parent=1 // pred_check_branch
      %19 = sbr.rel (0) target = $region5
    $region4: #{tpu_custom_call.1} parent=1 // pred_region
      %s21 = ssub.s32 128, 128
      %22 = vsyncadd [#allocation3], %s21
      %s23 = sshll.u32 [#allocation2], 4
      %s24 = int_to_ptr.vmem [resolvable:$true] %s23
      %29 = dma.hbm_to_vmem [thread:$0]  %s0, 128, %s24, [#allocation3], 64, 64, 4
    $region5: #{tpu_custom_call.1} parent=1 // pred_fallthru
      _
    // Predicated region
    $region6: #{tpu_custom_call.1} parent=1 // pred_check
      _
    $region7: #{tpu_custom_call.1} parent=1 // pred_check_branch
      %31 = sbr.rel (0) target = $region9
    $region8: #{tpu_custom_call.1} parent=1 // pred_region
      %s33 = ssub.s32 1024, 1024
      %34 = vsyncadd [#allocation6], %s33
      %s35 = sshll.u32 [#allocation5], 4
      %s36 = int_to_ptr.vmem [resolvable:$true] %s35
      %41 = dma.hbm_to_vmem [thread:$0]  %s1, 1024, %s36, [#allocation6], 64, 64, 4
    $region9: #{tpu_custom_call.1} parent=1 // pred_fallthru
      _
    // Predicated region
    $region10: #{tpu_custom_call.1} parent=1 // pred_check
      _
    $region11: #{tpu_custom_call.1} parent=1 // pred_check_branch
      %43 = sbr.rel (0) target = $region13
    $region12: #{tpu_custom_call.1} parent=1 // pred_region
      _
    $region13: #{tpu_custom_call.1} parent=1 // pred_fallthru
      _
    // Predicated region
    $region14: #{tpu_custom_call.1} parent=1 // pred_check
      _
    $region15: #{tpu_custom_call.1} parent=1 // pred_check_branch
      %45 = sbr.rel (0) target = $region17
    $region16: #{tpu_custom_call.1} parent=1 // pred_region
      %s47 = ssub.s32 1024, 1024
      %48 = vsyncadd [#allocation6], %s47
      %s49 = sshll.u32 [#allocation7], 4
      %s50 = int_to_ptr.vmem [resolvable:$true] %s49
      %55 = dma.hbm_to_vmem [thread:$0]  %s3, 1024, %s50, [#allocation6], 64, 64, 4
    $region17: #{tpu_custom_call.1} parent=1 // pred_fallthru
      _
    // Predicated region
    $region18: #{tpu_custom_call.1} parent=1 // pred_check
      _
    $region19: #{tpu_custom_call.1} parent=1 // pred_check_branch
      %57 = sbr.rel (0) target = $region21
    $region20: #{tpu_custom_call.1} parent=1 // pred_region
      _
    $region21: #{tpu_custom_call.1} parent=1 // pred_fallthru
      _
    // Predicated region
    $region22: #{tpu_custom_call.1} parent=1 // pred_check
      _
    $region23: #{tpu_custom_call.1} parent=1 // pred_check_branch
      %59 = sbr.rel (0) target = $region25
    $region24: #{tpu_custom_call.1} parent=1 // pred_region
      %s61 = ssub.s32 1024, 1024
      %62 = vsyncadd [#allocation9], %s61
      %s63 = sshll.u32 [#allocation8], 4
      %s64 = int_to_ptr.vmem [resolvable:$true] %s63
      %69 = dma.hbm_to_vmem [thread:$0]  %s5, 1024, %s64, [#allocation9], 64, 64, 4
    $region25: #{tpu_custom_call.1} parent=1 // pred_fallthru
      _
    // Predicated region
    $region26: #{tpu_custom_call.1} parent=1 // pred_check
      _
    $region27: #{tpu_custom_call.1} parent=1 // pred_check_branch
      %71 = sbr.rel (0) target = $region29
    $region28: #{tpu_custom_call.1} parent=1 // pred_region
      _
    $region29: #{tpu_custom_call.1} parent=1 // pred_fallthru
      _
    // Predicated region
    $region30: #{tpu_custom_call.1} parent=1 // pred_check
      _
    $region31: #{tpu_custom_call.1} parent=1 // pred_check_branch
      %73 = sbr.rel (0) target = $region33
    $region32: #{tpu_custom_call.1} parent=1 // pred_region
      %s75 = ssub.s32 1024, 1024
      %76 = vsyncadd [#allocation9], %s75
      %s77 = sshll.u32 [#allocation10], 4
      %s78 = int_to_ptr.vmem [resolvable:$true] %s77
      %83 = dma.hbm_to_vmem [thread:$0]  %s7, 1024, %s78, [#allocation9], 64, 64, 4
    $region33: #{tpu_custom_call.1} parent=1 // pred_fallthru
      _
    // Predicated region
    $region34: #{tpu_custom_call.1} parent=1 // pred_check
      _
    $region35: #{tpu_custom_call.1} parent=1 // pred_check_branch
      %85 = sbr.rel (0) target = $region37
    $region36: #{tpu_custom_call.1} parent=1 // pred_region
      _
    $region37: #{tpu_custom_call.1} parent=1 // pred_fallthru
      _
    // Predicated region
    $region38: #{tpu_custom_call.1} parent=1 // pred_check
      _
    $region39: #{tpu_custom_call.1} parent=1 // pred_check_branch
      %87 = sbr.rel (0) target = $region41
    $region40: #{tpu_custom_call.1} parent=1 // pred_region
      %88 = dma.done [#allocation3], 128
    $region41: #{tpu_custom_call.1} parent=1 // pred_fallthru
      _
    // Predicated region
    $region42: #{tpu_custom_call.1} parent=1 // pred_check
      _
    $region43: #{tpu_custom_call.1} parent=1 // pred_check_branch
      %90 = sbr.rel (0) target = $region45
    $region44: #{tpu_custom_call.1} parent=1 // pred_region
      %91 = dma.done [#allocation6], 1024
    $region45: #{tpu_custom_call.1} parent=1 // pred_fallthru
      _
    // Predicated region
    $region46: #{tpu_custom_call.1} parent=1 // pred_check
      _
    $region47: #{tpu_custom_call.1} parent=1 // pred_check_branch
      %93 = sbr.rel (0) target = $region49
    $region48: #{tpu_custom_call.1} parent=1 // pred_region
      %94 = dma.done [#allocation6], 1024
    $region49: #{tpu_custom_call.1} parent=1 // pred_fallthru
      _
    // Predicated region
    $region50: #{tpu_custom_call.1} parent=1 // pred_check
      _
    $region51: #{tpu_custom_call.1} parent=1 // pred_check_branch
      %96 = sbr.rel (0) target = $region53
    $region52: #{tpu_custom_call.1} parent=1 // pred_region
      %97 = dma.done [#allocation9], 1024
    $region53: #{tpu_custom_call.1} parent=1 // pred_fallthru
      _
    // Predicated region
    $region54: #{tpu_custom_call.1} parent=1 // pred_check
      _
    $region55: #{tpu_custom_call.1} parent=1 // pred_check_branch
      %99 = sbr.rel (0) target = $region57
    $region56: #{tpu_custom_call.1} parent=1 // pred_region
      %100 = dma.done [#allocation9], 1024
    $region57: #{tpu_custom_call.1} parent=1 // pred_fallthru
      _
    %v102 = vld [vmem:[#allocation2] sm:$0xf]
    %v103 = vld [vmem:[#allocation2 + $0x4] sm:$0xf]
    %v104 = vld [vmem:[#allocation5] sm:$0xf]
    %v105 = vld [vmem:[#allocation5 + $0x4] sm:$0xf]
    %v106 = vld [vmem:[#allocation5 + $0x8] sm:$0xf]
    %v107 = vld [vmem:[#allocation5 + $0xc] sm:$0xf]
    %v108 = vld [vmem:[#allocation5 + $0x10] sm:$0xf]
    %v109 = vld [vmem:[#allocation5 + $0x14] sm:$0xf]
    %v110 = vld [vmem:[#allocation5 + $0x18] sm:$0xf]
    %v111 = vld [vmem:[#allocation5 + $0x1c] sm:$0xf]
    %v112 = vld [vmem:[#allocation5 + $0x20] sm:$0xf]
    %v113 = vld [vmem:[#allocation5 + $0x24] sm:$0xf]
    %v114 = vld [vmem:[#allocation5 + $0x28] sm:$0xf]
    %v115 = vld [vmem:[#allocation5 + $0x2c] sm:$0xf]
    %v116 = vld [vmem:[#allocation5 + $0x30] sm:$0xf]
    %v117 = vld [vmem:[#allocation5 + $0x34] sm:$0xf]
    %v118 = vld [vmem:[#allocation5 + $0x38] sm:$0xf]
    %v119 = vld [vmem:[#allocation5 + $0x3c] sm:$0xf]
    %v120 = vld [vmem:[%s2] sm:$0x1]
    %v122 = vlaneseq
    %v123 = vshrl.u32 %v122, 7
    %v124 = vsub.s32 0, %v123
    %v125 = vrot.slane %v120, %v124
    %v129 = vunpack.c.l.b16 %v102
    %v130 = vunpack.c.l.b16 %v103
    %v131 = vpack.c.b16 %v130, %v129
    %v149 = vunpack.c.l.b16 %v104
    %v150 = vunpack.c.l.b16 %v105
    %v151 = vunpack.c.l.b16 %v106
    %v152 = vunpack.c.l.b16 %v107
    %v153 = vunpack.c.l.b16 %v108
    %v154 = vunpack.c.l.b16 %v109
    %v155 = vunpack.c.l.b16 %v110
    %v156 = vunpack.c.l.b16 %v111
    %v157 = vunpack.c.l.b16 %v112
    %v158 = vunpack.c.l.b16 %v113
    %v159 = vunpack.c.l.b16 %v114
    %v160 = vunpack.c.l.b16 %v115
    %v161 = vunpack.c.l.b16 %v116
    %v162 = vunpack.c.l.b16 %v117
    %v163 = vunpack.c.l.b16 %v118
    %v164 = vunpack.c.l.b16 %v119
    %v165 = vpack.c.b16 %v150, %v149
    %v166 = vpack.c.b16 %v152, %v151
    %v167 = vpack.c.b16 %v154, %v153
    %v168 = vpack.c.b16 %v156, %v155
    %v169 = vpack.c.b16 %v158, %v157
    %v170 = vpack.c.b16 %v160, %v159
    %v171 = vpack.c.b16 %v162, %v161
    %v172 = vpack.c.b16 %v164, %v163
    %181 = vmatprep.subr.bf16.mxu0 0
    %182 = vmatpush1.bf16.msra.mxu0 %v165
    %183 = vmatprep.subr.bf16.mxu0 0
    %184 = vmatpush1.bf16.msra.mxu0 %v166
    %185 = vmatprep.subr.bf16.mxu0 0
    %186 = vmatpush1.bf16.msra.mxu0 %v167
    %187 = vmatprep.subr.bf16.mxu0 0
    %188 = vmatpush1.bf16.msra.mxu0 %v168
    %189 = vmatprep.subr.bf16.mxu0 0
    %190 = vmatpush1.bf16.msra.mxu0 %v169
    %191 = vmatprep.subr.bf16.mxu0 0
    %192 = vmatpush1.bf16.msra.mxu0 %v170
    %193 = vmatprep.subr.bf16.mxu0 0
    %194 = vmatpush1.bf16.msra.mxu0 %v171
    %195 = vmatprep.subr.bf16.mxu0 0
    %196 = vmatpush1.bf16.msra.mxu0 %v172
    %197 = vmatprep.subr.bf16.mxu0 0
    %198 = vmatpush1.bf16.msra.mxu0 0
    %199 = vmatprep.subr.bf16.mxu0 0
    %200 = vmatpush1.bf16.msra.mxu0 0
    %201 = vmatprep.subr.bf16.mxu0 0
    %202 = vmatpush1.bf16.msra.mxu0 0
    %203 = vmatprep.subr.bf16.mxu0 0
    %204 = vmatpush1.bf16.msra.mxu0 0
    %205 = vmatprep.subr.bf16.mxu0 0
    %206 = vmatpush1.bf16.msra.mxu0 0
    %207 = vmatprep.subr.bf16.mxu0 0
    %208 = vmatpush1.bf16.msra.mxu0 0
    %209 = vmatprep.subr.bf16.mxu0 0
    %210 = vmatpush1.bf16.msra.mxu0 0
    %211 = vmatprep.subr.bf16.mxu0 0
    %212 = vmatpush1.bf16.msra.mxu0 0
    %213 = vmatprep.mubr.bf16.mxu0 0
    %214 = vmatmul.mubr.bf16.gmra.mrb[0].mxu0 %v131
    %v215 = vpop.f32.mrb[0].mxu0
    %v216 = vadd.f32 %v125, %v215
    %v217 = vpop.f32.mrb[0].mxu0
    %v218 = vpop.f32.mrb[0].mxu0
    %v219 = vadd.f32 %v125, %v218
    %v220 = vpop.f32.mrb[0].mxu0
    %221 = vdwg.mxu0
    %v222 = vtanh.pop %v216
    %v223 = vtanh.pop %v219
    %v224 = vpack.c.bf16 %v223, %v222
    %v225 = vld [vmem:[#allocation7] sm:$0xf]
    %v226 = vld [vmem:[#allocation7 + $0x4] sm:$0xf]
    %v227 = vld [vmem:[#allocation7 + $0x8] sm:$0xf]
    %v228 = vld [vmem:[#allocation7 + $0xc] sm:$0xf]
    %v229 = vld [vmem:[#allocation7 + $0x10] sm:$0xf]
    %v230 = vld [vmem:[#allocation7 + $0x14] sm:$0xf]
    %v231 = vld [vmem:[#allocation7 + $0x18] sm:$0xf]
    %v232 = vld [vmem:[#allocation7 + $0x1c] sm:$0xf]
    %v233 = vld [vmem:[#allocation7 + $0x20] sm:$0xf]
    %v234 = vld [vmem:[#allocation7 + $0x24] sm:$0xf]
    %v235 = vld [vmem:[#allocation7 + $0x28] sm:$0xf]
    %v236 = vld [vmem:[#allocation7 + $0x2c] sm:$0xf]
    %v237 = vld [vmem:[#allocation7 + $0x30] sm:$0xf]
    %v238 = vld [vmem:[#allocation7 + $0x34] sm:$0xf]
    %v239 = vld [vmem:[#allocation7 + $0x38] sm:$0xf]
    %v240 = vld [vmem:[#allocation7 + $0x3c] sm:$0xf]
    %v241 = vld [vmem:[%s4] sm:$0x1]
    %v243 = vlaneseq
    %v244 = vshrl.u32 %v243, 7
    %v245 = vsub.s32 0, %v244
    %v246 = vrot.slane %v241, %v245
    %v264 = vunpack.c.l.b16 %v225
    %v265 = vunpack.c.l.b16 %v226
    %v266 = vunpack.c.l.b16 %v227
    %v267 = vunpack.c.l.b16 %v228
    %v268 = vunpack.c.l.b16 %v229
    %v269 = vunpack.c.l.b16 %v230
    %v270 = vunpack.c.l.b16 %v231
    %v271 = vunpack.c.l.b16 %v232
    %v272 = vunpack.c.l.b16 %v233
    %v273 = vunpack.c.l.b16 %v234
    %v274 = vunpack.c.l.b16 %v235
    %v275 = vunpack.c.l.b16 %v236
    %v276 = vunpack.c.l.b16 %v237
    %v277 = vunpack.c.l.b16 %v238
    %v278 = vunpack.c.l.b16 %v239
    %v279 = vunpack.c.l.b16 %v240
    %v280 = vpack.c.b16 %v265, %v264
    %v281 = vpack.c.b16 %v267, %v266
    %v282 = vpack.c.b16 %v269, %v268
    %v283 = vpack.c.b16 %v271, %v270
    %v284 = vpack.c.b16 %v273, %v272
    %v285 = vpack.c.b16 %v275, %v274
    %v286 = vpack.c.b16 %v277, %v276
    %v287 = vpack.c.b16 %v279, %v278
    %296 = vmatprep.subr.bf16.mxu0 0
    %297 = vmatpush1.bf16.msra.mxu0 %v280
    %298 = vmatprep.subr.bf16.mxu0 0
    %299 = vmatpush1.bf16.msra.mxu0 %v281
    %300 = vmatprep.subr.bf16.mxu0 0
    %301 = vmatpush1.bf16.msra.mxu0 %v282
    %302 = vmatprep.subr.bf16.mxu0 0
    %303 = vmatpush1.bf16.msra.mxu0 %v283
    %304 = vmatprep.subr.bf16.mxu0 0
    %305 = vmatpush1.bf16.msra.mxu0 %v284
    %306 = vmatprep.subr.bf16.mxu0 0
    %307 = vmatpush1.bf16.msra.mxu0 %v285
    %308 = vmatprep.subr.bf16.mxu0 0
    %309 = vmatpush1.bf16.msra.mxu0 %v286
    %310 = vmatprep.subr.bf16.mxu0 0
    %311 = vmatpush1.bf16.msra.mxu0 %v287
    %312 = vmatprep.subr.bf16.mxu0 0
    %313 = vmatpush1.bf16.msra.mxu0 0
    %314 = vmatprep.subr.bf16.mxu0 0
    %315 = vmatpush1.bf16.msra.mxu0 0
    %316 = vmatprep.subr.bf16.mxu0 0
    %317 = vmatpush1.bf16.msra.mxu0 0
    %318 = vmatprep.subr.bf16.mxu0 0
    %319 = vmatpush1.bf16.msra.mxu0 0
    %320 = vmatprep.subr.bf16.mxu0 0
    %321 = vmatpush1.bf16.msra.mxu0 0
    %322 = vmatprep.subr.bf16.mxu0 0
    %323 = vmatpush1.bf16.msra.mxu0 0
    %324 = vmatprep.subr.bf16.mxu0 0
    %325 = vmatpush1.bf16.msra.mxu0 0
    %326 = vmatprep.subr.bf16.mxu0 0
    %327 = vmatpush1.bf16.msra.mxu0 0
    %328 = vmatprep.mubr.bf16.mxu0 0
    %329 = vmatmul.mubr.bf16.gmra.mrb[0].mxu0 %v224
    %v330 = vpop.f32.mrb[0].mxu0
    %v331 = vadd.f32 %v246, %v330
    %v332 = vpop.f32.mrb[0].mxu0
    %v333 = vpop.f32.mrb[0].mxu0
    %v334 = vadd.f32 %v246, %v333
    %v335 = vpop.f32.mrb[0].mxu0
    %336 = vdwg.mxu0
    %v337 = vtanh.pop %v331
    %v338 = vtanh.pop %v334
    %v339 = vpack.c.bf16 %v338, %v337
    %v340 = vld [vmem:[#allocation8] sm:$0xf]
    %v341 = vld [vmem:[#allocation8 + $0x4] sm:$0xf]
    %v342 = vld [vmem:[#allocation8 + $0x8] sm:$0xf]
    %v343 = vld [vmem:[#allocation8 + $0xc] sm:$0xf]
    %v344 = vld [vmem:[#allocation8 + $0x10] sm:$0xf]
    %v345 = vld [vmem:[#allocation8 + $0x14] sm:$0xf]
    %v346 = vld [vmem:[#allocation8 + $0x18] sm:$0xf]
    %v347 = vld [vmem:[#allocation8 + $0x1c] sm:$0xf]
    %v348 = vld [vmem:[#allocation8 + $0x20] sm:$0xf]
    %v349 = vld [vmem:[#allocation8 + $0x24] sm:$0xf]
    %v350 = vld [vmem:[#allocation8 + $0x28] sm:$0xf]
    %v351 = vld [vmem:[#allocation8 + $0x2c] sm:$0xf]
    %v352 = vld [vmem:[#allocation8 + $0x30] sm:$0xf]
    %v353 = vld [vmem:[#allocation8 + $0x34] sm:$0xf]
    %v354 = vld [vmem:[#allocation8 + $0x38] sm:$0xf]
    %v355 = vld [vmem:[#allocation8 + $0x3c] sm:$0xf]
    %v356 = vld [vmem:[%s6] sm:$0x1]
    %v358 = vlaneseq
    %v359 = vshrl.u32 %v358, 7
    %v360 = vsub.s32 0, %v359
    %v361 = vrot.slane %v356, %v360
    %v379 = vunpack.c.l.b16 %v340
    %v380 = vunpack.c.l.b16 %v341
    %v381 = vunpack.c.l.b16 %v342
    %v382 = vunpack.c.l.b16 %v343
    %v383 = vunpack.c.l.b16 %v344
    %v384 = vunpack.c.l.b16 %v345
    %v385 = vunpack.c.l.b16 %v346
    %v386 = vunpack.c.l.b16 %v347
    %v387 = vunpack.c.l.b16 %v348
    %v388 = vunpack.c.l.b16 %v349
    %v389 = vunpack.c.l.b16 %v350
    %v390 = vunpack.c.l.b16 %v351
    %v391 = vunpack.c.l.b16 %v352
    %v392 = vunpack.c.l.b16 %v353
    %v393 = vunpack.c.l.b16 %v354
    %v394 = vunpack.c.l.b16 %v355
    %v395 = vpack.c.b16 %v380, %v379
    %v396 = vpack.c.b16 %v382, %v381
    %v397 = vpack.c.b16 %v384, %v383
    %v398 = vpack.c.b16 %v386, %v385
    %v399 = vpack.c.b16 %v388, %v387
    %v400 = vpack.c.b16 %v390, %v389
    %v401 = vpack.c.b16 %v392, %v391
    %v402 = vpack.c.b16 %v394, %v393
    %411 = vmatprep.subr.bf16.mxu0 0
    %412 = vmatpush1.bf16.msra.mxu0 %v395
    %413 = vmatprep.subr.bf16.mxu0 0
    %414 = vmatpush1.bf16.msra.mxu0 %v396
    %415 = vmatprep.subr.bf16.mxu0 0
    %416 = vmatpush1.bf16.msra.mxu0 %v397
    %417 = vmatprep.subr.bf16.mxu0 0
    %418 = vmatpush1.bf16.msra.mxu0 %v398
    %419 = vmatprep.subr.bf16.mxu0 0
    %420 = vmatpush1.bf16.msra.mxu0 %v399
    %421 = vmatprep.subr.bf16.mxu0 0
    %422 = vmatpush1.bf16.msra.mxu0 %v400
    %423 = vmatprep.subr.bf16.mxu0 0
    %424 = vmatpush1.bf16.msra.mxu0 %v401
    %425 = vmatprep.subr.bf16.mxu0 0
    %426 = vmatpush1.bf16.msra.mxu0 %v402
    %427 = vmatprep.subr.bf16.mxu0 0
    %428 = vmatpush1.bf16.msra.mxu0 0
    %429 = vmatprep.subr.bf16.mxu0 0
    %430 = vmatpush1.bf16.msra.mxu0 0
    %431 = vmatprep.subr.bf16.mxu0 0
    %432 = vmatpush1.bf16.msra.mxu0 0
    %433 = vmatprep.subr.bf16.mxu0 0
    %434 = vmatpush1.bf16.msra.mxu0 0
    %435 = vmatprep.subr.bf16.mxu0 0
    %436 = vmatpush1.bf16.msra.mxu0 0
    %437 = vmatprep.subr.bf16.mxu0 0
    %438 = vmatpush1.bf16.msra.mxu0 0
    %439 = vmatprep.subr.bf16.mxu0 0
    %440 = vmatpush1.bf16.msra.mxu0 0
    %441 = vmatprep.subr.bf16.mxu0 0
    %442 = vmatpush1.bf16.msra.mxu0 0
    %443 = vmatprep.mubr.bf16.mxu0 0
    %444 = vmatmul.mubr.bf16.gmra.mrb[0].mxu0 %v339
    %v445 = vpop.f32.mrb[0].mxu0
    %v446 = vadd.f32 %v361, %v445
    %v447 = vpop.f32.mrb[0].mxu0
    %v448 = vpop.f32.mrb[0].mxu0
    %v449 = vadd.f32 %v361, %v448
    %v450 = vpop.f32.mrb[0].mxu0
    %451 = vdwg.mxu0
    %v452 = vtanh.pop %v446
    %v453 = vtanh.pop %v449
    %v454 = vpack.c.bf16 %v453, %v452
    %v455 = vld [vmem:[#allocation10] sm:$0xf]
    %v456 = vld [vmem:[#allocation10 + $0x4] sm:$0xf]
    %v457 = vld [vmem:[#allocation10 + $0x8] sm:$0xf]
    %v458 = vld [vmem:[#allocation10 + $0xc] sm:$0xf]
    %v459 = vld [vmem:[#allocation10 + $0x10] sm:$0xf]
    %v460 = vld [vmem:[#allocation10 + $0x14] sm:$0xf]
    %v461 = vld [vmem:[#allocation10 + $0x18] sm:$0xf]
    %v462 = vld [vmem:[#allocation10 + $0x1c] sm:$0xf]
    %v463 = vld [vmem:[#allocation10 + $0x20] sm:$0xf]
    %v464 = vld [vmem:[#allocation10 + $0x24] sm:$0xf]
    %v465 = vld [vmem:[#allocation10 + $0x28] sm:$0xf]
    %v466 = vld [vmem:[#allocation10 + $0x2c] sm:$0xf]
    %v467 = vld [vmem:[#allocation10 + $0x30] sm:$0xf]
    %v468 = vld [vmem:[#allocation10 + $0x34] sm:$0xf]
    %v469 = vld [vmem:[#allocation10 + $0x38] sm:$0xf]
    %v470 = vld [vmem:[#allocation10 + $0x3c] sm:$0xf]
    %v471 = vld [vmem:[%s8] sm:$0x1]
    %v473 = vlaneseq
    %v474 = vshrl.u32 %v473, 7
    %v475 = vsub.s32 0, %v474
    %v476 = vrot.slane %v471, %v475
    %v494 = vunpack.c.l.b16 %v455
    %v495 = vunpack.c.l.b16 %v456
    %v496 = vunpack.c.l.b16 %v457
    %v497 = vunpack.c.l.b16 %v458
    %v498 = vunpack.c.l.b16 %v459
    %v499 = vunpack.c.l.b16 %v460
    %v500 = vunpack.c.l.b16 %v461
    %v501 = vunpack.c.l.b16 %v462
    %v502 = vunpack.c.l.b16 %v463
    %v503 = vunpack.c.l.b16 %v464
    %v504 = vunpack.c.l.b16 %v465
    %v505 = vunpack.c.l.b16 %v466
    %v506 = vunpack.c.l.b16 %v467
    %v507 = vunpack.c.l.b16 %v468
    %v508 = vunpack.c.l.b16 %v469
    %v509 = vunpack.c.l.b16 %v470
    %v510 = vpack.c.b16 %v495, %v494
    %v511 = vpack.c.b16 %v497, %v496
    %v512 = vpack.c.b16 %v499, %v498
    %v513 = vpack.c.b16 %v501, %v500
    %v514 = vpack.c.b16 %v503, %v502
    %v515 = vpack.c.b16 %v505, %v504
    %v516 = vpack.c.b16 %v507, %v506
    %v517 = vpack.c.b16 %v509, %v508
    %526 = vmatprep.subr.bf16.mxu0 0
    %527 = vmatpush1.bf16.msra.mxu0 %v510
    %528 = vmatprep.subr.bf16.mxu0 0
    %529 = vmatpush1.bf16.msra.mxu0 %v511
    %530 = vmatprep.subr.bf16.mxu0 0
    %531 = vmatpush1.bf16.msra.mxu0 %v512
    %532 = vmatprep.subr.bf16.mxu0 0
    %533 = vmatpush1.bf16.msra.mxu0 %v513
    %534 = vmatprep.subr.bf16.mxu0 0
    %535 = vmatpush1.bf16.msra.mxu0 %v514
    %536 = vmatprep.subr.bf16.mxu0 0
    %537 = vmatpush1.bf16.msra.mxu0 %v515
    %538 = vmatprep.subr.bf16.mxu0 0
    %539 = vmatpush1.bf16.msra.mxu0 %v516
    %540 = vmatprep.subr.bf16.mxu0 0
    %541 = vmatpush1.bf16.msra.mxu0 %v517
    %542 = vmatprep.subr.bf16.mxu0 0
    %543 = vmatpush1.bf16.msra.mxu0 0
    %544 = vmatprep.subr.bf16.mxu0 0
    %545 = vmatpush1.bf16.msra.mxu0 0
    %546 = vmatprep.subr.bf16.mxu0 0
    %547 = vmatpush1.bf16.msra.mxu0 0
    %548 = vmatprep.subr.bf16.mxu0 0
    %549 = vmatpush1.bf16.msra.mxu0 0
    %550 = vmatprep.subr.bf16.mxu0 0
    %551 = vmatpush1.bf16.msra.mxu0 0
    %552 = vmatprep.subr.bf16.mxu0 0
    %553 = vmatpush1.bf16.msra.mxu0 0
    %554 = vmatprep.subr.bf16.mxu0 0
    %555 = vmatpush1.bf16.msra.mxu0 0
    %556 = vmatprep.subr.bf16.mxu0 0
    %557 = vmatpush1.bf16.msra.mxu0 0
    %558 = vmatprep.mubr.bf16.mxu0 0
    %559 = vmatmul.mubr.bf16.gmra.mrb[0].mxu0 %v454
    %v560 = vpop.f32.mrb[0].mxu0
    %v561 = vadd.f32 %v476, %v560
    %v562 = vpop.f32.mrb[0].mxu0
    %v563 = vpop.f32.mrb[0].mxu0
    %v564 = vadd.f32 %v476, %v563
    %v565 = vpop.f32.mrb[0].mxu0
    %566 = vdwg.mxu0
    %v567 = vpack.c.bf16 %v564, %v561
    %v569 = vunpack.c.l.b16 %v567
    %v570 = vunpack.c.h.b16 %v567
    %v571 = vpack.c.b16 %v569, %v569
    %v572 = vpack.c.b16 %v570, %v570
    %575 = vst [vmem:[#allocation11] sm:$0xf] %v571
    %576 = vst [vmem:[#allocation11 + $0x4] sm:$0xf] %v572
    // Predicated region
    $region58: #{tpu_custom_call.1} parent=1 // pred_check
      _
    $region59: #{tpu_custom_call.1} parent=1 // pred_check_branch
      %578 = sbr.rel (0) target = $region61
    $region60: #{tpu_custom_call.1} parent=1 // pred_region
      %s580 = ssub.s32 128, 128
      %581 = vsyncadd [#allocation4], %s580
      %s582 = sshll.u32 [#allocation11], 4
      %s583 = int_to_ptr.vmem [resolvable:$true] %s582
      %588 = dma.vmem_to_hbm [thread:$0]  %s583, 128, %s9, [#allocation4], 64, 64, 4
    $region61: #{tpu_custom_call.1} parent=1 // pred_fallthru
      _
    // Predicated region
    $region62: #{tpu_custom_call.1} parent=1 // pred_check
      _
    $region63: #{tpu_custom_call.1} parent=1 // pred_check_branch
      %590 = sbr.rel (0) target = $region65
    $region64: #{tpu_custom_call.1} parent=1 // pred_region
      %591 = dma.done [#allocation4], 128
    $region65: #{tpu_custom_call.1} parent=1 // pred_fallthru
      _
    %592 = vsyncpa [#allocation3], 1
    %593 = vsyncpa [#allocation6], 1
    %594 = vsyncpa [#allocation9], 1
    %595 = vsyncpa [#allocation4], 1

// kernel: tpu_custom_call.1
$region0: #{tpu_custom_call.1}
  #allocation0 [shape = 'u32[]', space=smem, size = 0x4, offset = 0x4, fixed_abs, tag = 'smem constant byte address 0x4 - core index']
  #allocation1 [shape = 'u32[144,128]{1,0:T(1,128)}', space=vmem, size = 0x12000, scoped, tag = 'internal scratch']
  %s0 = inlined_call_operand.hbm [shape: bf16[16,128], index: 0, kind: input, shape index: {}]
  %s1 = inlined_call_operand.hbm [shape: bf16[128,128], index: 1, kind: input, shape index: {}]
  %s2 = inlined_call_operand.vmem [shape: f32[1,128], index: 2, kind: input, shape index: {}]
  %s3 = inlined_call_operand.hbm [shape: bf16[128,128], index: 3, kind: input, shape index: {}]
  %s4 = inlined_call_operand.vmem [shape: f32[1,128], index: 4, kind: input, shape index: {}]
  %s5 = inlined_call_operand.hbm [shape: bf16[128,128], index: 5, kind: input, shape index: {}]
  %s6 = inlined_call_operand.vmem [shape: f32[1,128], index: 6, kind: input, shape index: {}]
  %s7 = inlined_call_operand.hbm [shape: bf16[128,128], index: 7, kind: input, shape index: {}]
  %s8 = inlined_call_operand.vmem [shape: f32[1,128], index: 8, kind: input, shape index: {}]
  %s9 = inlined_call_operand.hbm [shape: bf16[16,128], index: 9, kind: output, shape index: {}]
  %s10 = sld [smem:[#allocation0]]
  $region66: #{tpu_custom_call.1} parent=0
    _
  %s12 = ssub.s32 1, %s10
  %s13 = scalar_select 0, %s12, %s10
  $region1: #{tpu_custom_call.1} parent=0
    #allocation2 [shape = 'u8[4096]{0}', space=vmem, size = 0x1000, scoped, tag = 'input window, operand 0, single buffered']
    #allocation3 [shape = 's32[1]{0}', space=sflag, size = 0x4, scoped, tag = 'scoped memory for tpu_custom_call.1']
    #allocation4 [shape = 's32[1]{0}', space=sflag, size = 0x4, scoped, tag = 'scoped memory for tpu_custom_call.1']
    #allocation5 [shape = 'u8[32768]{0}', space=vmem, size = 0x8000, scoped, tag = 'input window, operand 1, single buffered']
    #allocation6 [shape = 's32[1]{0}', space=sflag, size = 0x4, scoped, tag = 'scoped memory for tpu_custom_call.1']
    #allocation7 [shape = 'u8[32768]{0}', space=vmem, size = 0x8000, scoped, tag = 'input window, operand 3, single buffered']
    #allocation8 [shape = 'u8[32768]{0}', space=vmem, size = 0x8000, scoped, tag = 'input window, operand 5, single buffered']
    #allocation9 [shape = 's32[1]{0}', space=sflag, size = 0x4, scoped, tag = 'scoped memory for tpu_custom_call.1']
    #allocation10 [shape = 'u8[32768]{0}', space=vmem, size = 0x8000, scoped, tag = 'input window, operand 7, single buffered']
    #allocation11 [shape = 'u8[4096]{0}', space=vmem, size = 0x1000, scoped, tag = 'output window, operand 0, single buffered']
    %14 = vsyncpa [#allocation3], 0
    %15 = vsyncpa [#allocation6], 0
    %16 = vsyncpa [#allocation9], 0
    %17 = vsyncpa [#allocation4], 0
    // Predicated region
    $region2: #{tpu_custom_call.1} parent=1 // pred_check
      _
    $region3: #{tpu_custom_call.1} parent=1 // pred_check_branch
      %19 = sbr.rel (0) target = $region5
    $region4: #{tpu_custom_call.1} parent=1 // pred_region
      %s21 = ssub.s32 128, 128
      %22 = vsyncadd [#allocation3], %s21
      %s23 = sshll.u32 [#allocation2], 4
      %s24 = int_to_ptr.vmem [resolvable:$true] %s23
      %29 = dma.hbm_to_vmem [thread:$0]  %s0, 128, %s24, [#allocation3], 64, 64, 4
    $region5: #{tpu_custom_call.1} parent=1 // pred_fallthru
      _
    // Predicated region
    $region6: #{tpu_custom_call.1} parent=1 // pred_check
      _
    $region7: #{tpu_custom_call.1} parent=1 // pred_check_branch
      %31 = sbr.rel (0) target = $region9
    $region8: #{tpu_custom_call.1} parent=1 // pred_region
      %s33 = ssub.s32 1024, 1024
      %34 = vsyncadd [#allocation6], %s33
      %s35 = sshll.u32 [#allocation5], 4
      %s36 = int_to_ptr.vmem [resolvable:$true] %s35
      %41 = dma.hbm_to_vmem [thread:$0]  %s1, 1024, %s36, [#allocation6], 64, 64, 4
    $region9: #{tpu_custom_call.1} parent=1 // pred_fallthru
      _
    // Predicated region
    $region10: #{tpu_custom_call.1} parent=1 // pred_check
      _
    $region11: #{tpu_custom_call.1} parent=1 // pred_check_branch
      %43 = sbr.rel (0) target = $region13
    $region12: #{tpu_custom_call.1} parent=1 // pred_region
      _
    $region13: #{tpu_custom_call.1} parent=1 // pred_fallthru
      _
    // Predicated region
    $region14: #{tpu_custom_call.1} parent=1 // pred_check
      _
    $region15: #{tpu_custom_call.1} parent=1 // pred_check_branch
      %45 = sbr.rel (0) target = $region17
    $region16: #{tpu_custom_call.1} parent=1 // pred_region
      %s47 = ssub.s32 1024, 1024
      %48 = vsyncadd [#allocation6], %s47
      %s49 = sshll.u32 [#allocation7], 4
      %s50 = int_to_ptr.vmem [resolvable:$true] %s49
      %55 = dma.hbm_to_vmem [thread:$0]  %s3, 1024, %s50, [#allocation6], 64, 64, 4
    $region17: #{tpu_custom_call.1} parent=1 // pred_fallthru
      _
    // Predicated region
    $region18: #{tpu_custom_call.1} parent=1 // pred_check
      _
    $region19: #{tpu_custom_call.1} parent=1 // pred_check_branch
      %57 = sbr.rel (0) target = $region21
    $region20: #{tpu_custom_call.1} parent=1 // pred_region
      _
    $region21: #{tpu_custom_call.1} parent=1 // pred_fallthru
      _
    // Predicated region
    $region22: #{tpu_custom_call.1} parent=1 // pred_check
      _
    $region23: #{tpu_custom_call.1} parent=1 // pred_check_branch
      %59 = sbr.rel (0) target = $region25
    $region24: #{tpu_custom_call.1} parent=1 // pred_region
      %s61 = ssub.s32 1024, 1024
      %62 = vsyncadd [#allocation9], %s61
      %s63 = sshll.u32 [#allocation8], 4
      %s64 = int_to_ptr.vmem [resolvable:$true] %s63
      %69 = dma.hbm_to_vmem [thread:$0]  %s5, 1024, %s64, [#allocation9], 64, 64, 4
    $region25: #{tpu_custom_call.1} parent=1 // pred_fallthru
      _
    // Predicated region
    $region26: #{tpu_custom_call.1} parent=1 // pred_check
      _
    $region27: #{tpu_custom_call.1} parent=1 // pred_check_branch
      %71 = sbr.rel (0) target = $region29
    $region28: #{tpu_custom_call.1} parent=1 // pred_region
      _
    $region29: #{tpu_custom_call.1} parent=1 // pred_fallthru
      _
    // Predicated region
    $region30: #{tpu_custom_call.1} parent=1 // pred_check
      _
    $region31: #{tpu_custom_call.1} parent=1 // pred_check_branch
      %73 = sbr.rel (0) target = $region33
    $region32: #{tpu_custom_call.1} parent=1 // pred_region
      %s75 = ssub.s32 1024, 1024
      %76 = vsyncadd [#allocation9], %s75
      %s77 = sshll.u32 [#allocation10], 4
      %s78 = int_to_ptr.vmem [resolvable:$true] %s77
      %83 = dma.hbm_to_vmem [thread:$0]  %s7, 1024, %s78, [#allocation9], 64, 64, 4
    $region33: #{tpu_custom_call.1} parent=1 // pred_fallthru
      _
    // Predicated region
    $region34: #{tpu_custom_call.1} parent=1 // pred_check
      _
    $region35: #{tpu_custom_call.1} parent=1 // pred_check_branch
      %85 = sbr.rel (0) target = $region37
    $region36: #{tpu_custom_call.1} parent=1 // pred_region
      _
    $region37: #{tpu_custom_call.1} parent=1 // pred_fallthru
      _
    // Predicated region
    $region38: #{tpu_custom_call.1} parent=1 // pred_check
      _
    $region39: #{tpu_custom_call.1} parent=1 // pred_check_branch
      %87 = sbr.rel (0) target = $region41
    $region40: #{tpu_custom_call.1} parent=1 // pred_region
      %88 = dma.done [#allocation3], 128
    $region41: #{tpu_custom_call.1} parent=1 // pred_fallthru
      _
    // Predicated region
    $region42: #{tpu_custom_call.1} parent=1 // pred_check
      _
    $region43: #{tpu_custom_call.1} parent=1 // pred_check_branch
      %90 = sbr.rel (0) target = $region45
    $region44: #{tpu_custom_call.1} parent=1 // pred_region
      %91 = dma.done [#allocation6], 1024
    $region45: #{tpu_custom_call.1} parent=1 // pred_fallthru
      _
    // Predicated region
    $region46: #{tpu_custom_call.1} parent=1 // pred_check
      _
    $region47: #{tpu_custom_call.1} parent=1 // pred_check_branch
      %93 = sbr.rel (0) target = $region49
    $region48: #{tpu_custom_call.1} parent=1 // pred_region
      %94 = dma.done [#allocation6], 1024
    $region49: #{tpu_custom_call.1} parent=1 // pred_fallthru
      _
    // Predicated region
    $region50: #{tpu_custom_call.1} parent=1 // pred_check
      _
    $region51: #{tpu_custom_call.1} parent=1 // pred_check_branch
      %96 = sbr.rel (0) target = $region53
    $region52: #{tpu_custom_call.1} parent=1 // pred_region
      %97 = dma.done [#allocation9], 1024
    $region53: #{tpu_custom_call.1} parent=1 // pred_fallthru
      _
    // Predicated region
    $region54: #{tpu_custom_call.1} parent=1 // pred_check
      _
    $region55: #{tpu_custom_call.1} parent=1 // pred_check_branch
      %99 = sbr.rel (0) target = $region57
    $region56: #{tpu_custom_call.1} parent=1 // pred_region
      %100 = dma.done [#allocation9], 1024
    $region57: #{tpu_custom_call.1} parent=1 // pred_fallthru
      _
    %v102 = vld [vmem:[#allocation2] sm:$0xf]
    %v103 = vld [vmem:[#allocation2 + $0x4] sm:$0xf]
    %v104 = vld [vmem:[#allocation5] sm:$0xf]
    %v105 = vld [vmem:[#allocation5 + $0x4] sm:$0xf]
    %v106 = vld [vmem:[#allocation5 + $0x8] sm:$0xf]
    %v107 = vld [vmem:[#allocation5 + $0xc] sm:$0xf]
    %v108 = vld [vmem:[#allocation5 + $0x10] sm:$0xf]
    %v109 = vld [vmem:[#allocation5 + $0x14] sm:$0xf]
    %v110 = vld [vmem:[#allocation5 + $0x18] sm:$0xf]
    %v111 = vld [vmem:[#allocation5 + $0x1c] sm:$0xf]
    %v112 = vld [vmem:[#allocation5 + $0x20] sm:$0xf]
    %v113 = vld [vmem:[#allocation5 + $0x24] sm:$0xf]
    %v114 = vld [vmem:[#allocation5 + $0x28] sm:$0xf]
    %v115 = vld [vmem:[#allocation5 + $0x2c] sm:$0xf]
    %v116 = vld [vmem:[#allocation5 + $0x30] sm:$0xf]
    %v117 = vld [vmem:[#allocation5 + $0x34] sm:$0xf]
    %v118 = vld [vmem:[#allocation5 + $0x38] sm:$0xf]
    %v119 = vld [vmem:[#allocation5 + $0x3c] sm:$0xf]
    %v120 = vld [vmem:[%s2] sm:$0x1]
    %v122 = vlaneseq
    %v123 = vshrl.u32 %v122, 7
    %v124 = vsub.s32 0, %v123
    %v125 = vrot.slane %v120, %v124
    %v129 = vunpack.c.l.b16 %v102
    %v130 = vunpack.c.l.b16 %v103
    %v131 = vpack.c.b16 %v130, %v129
    %v149 = vunpack.c.l.b16 %v104
    %v150 = vunpack.c.l.b16 %v105
    %v151 = vunpack.c.l.b16 %v106
    %v152 = vunpack.c.l.b16 %v107
    %v153 = vunpack.c.l.b16 %v108
    %v154 = vunpack.c.l.b16 %v109
    %v155 = vunpack.c.l.b16 %v110
    %v156 = vunpack.c.l.b16 %v111
    %v157 = vunpack.c.l.b16 %v112
    %v158 = vunpack.c.l.b16 %v113
    %v159 = vunpack.c.l.b16 %v114
    %v160 = vunpack.c.l.b16 %v115
    %v161 = vunpack.c.l.b16 %v116
    %v162 = vunpack.c.l.b16 %v117
    %v163 = vunpack.c.l.b16 %v118
    %v164 = vunpack.c.l.b16 %v119
    %v165 = vpack.c.b16 %v150, %v149
    %v166 = vpack.c.b16 %v152, %v151
    %v167 = vpack.c.b16 %v154, %v153
    %v168 = vpack.c.b16 %v156, %v155
    %v169 = vpack.c.b16 %v158, %v157
    %v170 = vpack.c.b16 %v160, %v159
    %v171 = vpack.c.b16 %v162, %v161
    %v172 = vpack.c.b16 %v164, %v163
    %181 = vmatprep.subr.bf16.mxu0 0
    %182 = vmatpush1.bf16.msra.mxu0 %v165
    %183 = vmatprep.subr.bf16.mxu0 0
    %184 = vmatpush1.bf16.msra.mxu0 %v166
    %185 = vmatprep.subr.bf16.mxu0 0
    %186 = vmatpush1.bf16.msra.mxu0 %v167
    %187 = vmatprep.subr.bf16.mxu0 0
    %188 = vmatpush1.bf16.msra.mxu0 %v168
    %189 = vmatprep.subr.bf16.mxu0 0
    %190 = vmatpush1.bf16.msra.mxu0 %v169
    %191 = vmatprep.subr.bf16.mxu0 0
    %192 = vmatpush1.bf16.msra.mxu0 %v170
    %193 = vmatprep.subr.bf16.mxu0 0
    %194 = vmatpush1.bf16.msra.mxu0 %v171
    %195 = vmatprep.subr.bf16.mxu0 0
    %196 = vmatpush1.bf16.msra.mxu0 %v172
    %197 = vmatprep.subr.bf16.mxu0 0
    %198 = vmatpush1.bf16.msra.mxu0 0
    %199 = vmatprep.subr.bf16.mxu0 0
    %200 = vmatpush1.bf16.msra.mxu0 0
    %201 = vmatprep.subr.bf16.mxu0 0
    %202 = vmatpush1.bf16.msra.mxu0 0
    %203 = vmatprep.subr.bf16.mxu0 0
    %204 = vmatpush1.bf16.msra.mxu0 0
    %205 = vmatprep.subr.bf16.mxu0 0
    %206 = vmatpush1.bf16.msra.mxu0 0
    %207 = vmatprep.subr.bf16.mxu0 0
    %208 = vmatpush1.bf16.msra.mxu0 0
    %209 = vmatprep.subr.bf16.mxu0 0
    %210 = vmatpush1.bf16.msra.mxu0 0
    %211 = vmatprep.subr.bf16.mxu0 0
    %212 = vmatpush1.bf16.msra.mxu0 0
    %213 = vmatprep.mubr.bf16.mxu0 0
    %214 = vmatmul.mubr.bf16.gmra.mrb[0].mxu0 %v131
    %v215 = vpop.f32.mrb[0].mxu0
    %v216 = vadd.f32 %v125, %v215
    %v217 = vpop.f32.mrb[0].mxu0
    %v218 = vpop.f32.mrb[0].mxu0
    %v219 = vadd.f32 %v125, %v218
    %v220 = vpop.f32.mrb[0].mxu0
    %221 = vdwg.mxu0
    %v222 = vtanh.pop %v216
    %v223 = vtanh.pop %v219
    %v224 = vpack.c.bf16 %v223, %v222
    %v225 = vld [vmem:[#allocation7] sm:$0xf]
    %v226 = vld [vmem:[#allocation7 + $0x4] sm:$0xf]
    %v227 = vld [vmem:[#allocation7 + $0x8] sm:$0xf]
    %v228 = vld [vmem:[#allocation7 + $0xc] sm:$0xf]
    %v229 = vld [vmem:[#allocation7 + $0x10] sm:$0xf]
    %v230 = vld [vmem:[#allocation7 + $0x14] sm:$0xf]
    %v231 = vld [vmem:[#allocation7 + $0x18] sm:$0xf]
    %v232 = vld [vmem:[#allocation7 + $0x1c] sm:$0xf]
    %v233 = vld [vmem:[#allocation7 + $0x20] sm:$0xf]
    %v234 = vld [vmem:[#allocation7 + $0x24] sm:$0xf]
    %v235 = vld [vmem:[#allocation7 + $0x28] sm:$0xf]
    %v236 = vld [vmem:[#allocation7 + $0x2c] sm:$0xf]
    %v237 = vld [vmem:[#allocation7 + $0x30] sm:$0xf]
    %v238 = vld [vmem:[#allocation7 + $0x34] sm:$0xf]
    %v239 = vld [vmem:[#allocation7 + $0x38] sm:$0xf]
    %v240 = vld [vmem:[#allocation7 + $0x3c] sm:$0xf]
    %v241 = vld [vmem:[%s4] sm:$0x1]
    %v243 = vlaneseq
    %v244 = vshrl.u32 %v243, 7
    %v245 = vsub.s32 0, %v244
    %v246 = vrot.slane %v241, %v245
    %v264 = vunpack.c.l.b16 %v225
    %v265 = vunpack.c.l.b16 %v226
    %v266 = vunpack.c.l.b16 %v227
    %v267 = vunpack.c.l.b16 %v228
    %v268 = vunpack.c.l.b16 %v229
    %v269 = vunpack.c.l.b16 %v230
    %v270 = vunpack.c.l.b16 %v231
    %v271 = vunpack.c.l.b16 %v232
    %v272 = vunpack.c.l.b16 %v233
    %v273 = vunpack.c.l.b16 %v234
    %v274 = vunpack.c.l.b16 %v235
    %v275 = vunpack.c.l.b16 %v236
    %v276 = vunpack.c.l.b16 %v237
    %v277 = vunpack.c.l.b16 %v238
    %v278 = vunpack.c.l.b16 %v239
    %v279 = vunpack.c.l.b16 %v240
    %v280 = vpack.c.b16 %v265, %v264
    %v281 = vpack.c.b16 %v267, %v266
    %v282 = vpack.c.b16 %v269, %v268
    %v283 = vpack.c.b16 %v271, %v270
    %v284 = vpack.c.b16 %v273, %v272
    %v285 = vpack.c.b16 %v275, %v274
    %v286 = vpack.c.b16 %v277, %v276
    %v287 = vpack.c.b16 %v279, %v278
    %296 = vmatprep.subr.bf16.mxu0 0
    %297 = vmatpush1.bf16.msra.mxu0 %v280
    %298 = vmatprep.subr.bf16.mxu0 0
    %299 = vmatpush1.bf16.msra.mxu0 %v281
    %300 = vmatprep.subr.bf16.mxu0 0
    %301 = vmatpush1.bf16.msra.mxu0 %v282
    %302 = vmatprep.subr.bf16.mxu0 0
    %303 = vmatpush1.bf16.msra.mxu0 %v283
    %304 = vmatprep.subr.bf16.mxu0 0
    %305 = vmatpush1.bf16.msra.mxu0 %v284
    %306 = vmatprep.subr.bf16.mxu0 0
    %307 = vmatpush1.bf16.msra.mxu0 %v285
    %308 = vmatprep.subr.bf16.mxu0 0
    %309 = vmatpush1.bf16.msra.mxu0 %v286
    %310 = vmatprep.subr.bf16.mxu0 0
    %311 = vmatpush1.bf16.msra.mxu0 %v287
    %312 = vmatprep.subr.bf16.mxu0 0
    %313 = vmatpush1.bf16.msra.mxu0 0
    %314 = vmatprep.subr.bf16.mxu0 0
    %315 = vmatpush1.bf16.msra.mxu0 0
    %316 = vmatprep.subr.bf16.mxu0 0
    %317 = vmatpush1.bf16.msra.mxu0 0
    %318 = vmatprep.subr.bf16.mxu0 0
    %319 = vmatpush1.bf16.msra.mxu0 0
    %320 = vmatprep.subr.bf16.mxu0 0
    %321 = vmatpush1.bf16.msra.mxu0 0
    %322 = vmatprep.subr.bf16.mxu0 0
    %323 = vmatpush1.bf16.msra.mxu0 0
    %324 = vmatprep.subr.bf16.mxu0 0
    %325 = vmatpush1.bf16.msra.mxu0 0
    %326 = vmatprep.subr.bf16.mxu0 0
    %327 = vmatpush1.bf16.msra.mxu0 0
    %328 = vmatprep.mubr.bf16.mxu0 0
    %329 = vmatmul.mubr.bf16.gmra.mrb[0].mxu0 %v224
    %v330 = vpop.f32.mrb[0].mxu0
    %v331 = vadd.f32 %v246, %v330
    %v332 = vpop.f32.mrb[0].mxu0
    %v333 = vpop.f32.mrb[0].mxu0
    %v334 = vadd.f32 %v246, %v333
    %v335 = vpop.f32.mrb[0].mxu0
    %336 = vdwg.mxu0
    %v337 = vtanh.pop %v331
    %v338 = vtanh.pop %v334
    %v339 = vpack.c.bf16 %v338, %v337
    %v340 = vld [vmem:[#allocation8] sm:$0xf]
    %v341 = vld [vmem:[#allocation8 + $0x4] sm:$0xf]
    %v342 = vld [vmem:[#allocation8 + $0x8] sm:$0xf]
    %v343 = vld [vmem:[#allocation8 + $0xc] sm:$0xf]
    %v344 = vld [vmem:[#allocation8 + $0x10] sm:$0xf]
    %v345 = vld [vmem:[#allocation8 + $0x14] sm:$0xf]
    %v346 = vld [vmem:[#allocation8 + $0x18] sm:$0xf]
    %v347 = vld [vmem:[#allocation8 + $0x1c] sm:$0xf]
    %v348 = vld [vmem:[#allocation8 + $0x20] sm:$0xf]
    %v349 = vld [vmem:[#allocation8 + $0x24] sm:$0xf]
    %v350 = vld [vmem:[#allocation8 + $0x28] sm:$0xf]
    %v351 = vld [vmem:[#allocation8 + $0x2c] sm:$0xf]
    %v352 = vld [vmem:[#allocation8 + $0x30] sm:$0xf]
    %v353 = vld [vmem:[#allocation8 + $0x34] sm:$0xf]
    %v354 = vld [vmem:[#allocation8 + $0x38] sm:$0xf]
    %v355 = vld [vmem:[#allocation8 + $0x3c] sm:$0xf]
    %v356 = vld [vmem:[%s6] sm:$0x1]
    %v358 = vlaneseq
    %v359 = vshrl.u32 %v358, 7
    %v360 = vsub.s32 0, %v359
    %v361 = vrot.slane %v356, %v360
    %v379 = vunpack.c.l.b16 %v340
    %v380 = vunpack.c.l.b16 %v341
    %v381 = vunpack.c.l.b16 %v342
    %v382 = vunpack.c.l.b16 %v343
    %v383 = vunpack.c.l.b16 %v344
    %v384 = vunpack.c.l.b16 %v345
    %v385 = vunpack.c.l.b16 %v346
    %v386 = vunpack.c.l.b16 %v347
    %v387 = vunpack.c.l.b16 %v348
    %v388 = vunpack.c.l.b16 %v349
    %v389 = vunpack.c.l.b16 %v350
    %v390 = vunpack.c.l.b16 %v351
    %v391 = vunpack.c.l.b16 %v352
    %v392 = vunpack.c.l.b16 %v353
    %v393 = vunpack.c.l.b16 %v354
    %v394 = vunpack.c.l.b16 %v355
    %v395 = vpack.c.b16 %v380, %v379
    %v396 = vpack.c.b16 %v382, %v381
    %v397 = vpack.c.b16 %v384, %v383
    %v398 = vpack.c.b16 %v386, %v385
    %v399 = vpack.c.b16 %v388, %v387
    %v400 = vpack.c.b16 %v390, %v389
    %v401 = vpack.c.b16 %v392, %v391
    %v402 = vpack.c.b16 %v394, %v393
    %411 = vmatprep.subr.bf16.mxu0 0
    %412 = vmatpush1.bf16.msra.mxu0 %v395
    %413 = vmatprep.subr.bf16.mxu0 0
    %414 = vmatpush1.bf16.msra.mxu0 %v396
    %415 = vmatprep.subr.bf16.mxu0 0
    %416 = vmatpush1.bf16.msra.mxu0 %v397
    %417 = vmatprep.subr.bf16.mxu0 0
    %418 = vmatpush1.bf16.msra.mxu0 %v398
    %419 = vmatprep.subr.bf16.mxu0 0
    %420 = vmatpush1.bf16.msra.mxu0 %v399
    %421 = vmatprep.subr.bf16.mxu0 0
    %422 = vmatpush1.bf16.msra.mxu0 %v400
    %423 = vmatprep.subr.bf16.mxu0 0
    %424 = vmatpush1.bf16.msra.mxu0 %v401
    %425 = vmatprep.subr.bf16.mxu0 0
    %426 = vmatpush1.bf16.msra.mxu0 %v402
    %427 = vmatprep.subr.bf16.mxu0 0
    %428 = vmatpush1.bf16.msra.mxu0 0
    %429 = vmatprep.subr.bf16.mxu0 0
    %430 = vmatpush1.bf16.msra.mxu0 0
    %431 = vmatprep.subr.bf16.mxu0 0
    %432 = vmatpush1.bf16.msra.mxu0 0
    %433 = vmatprep.subr.bf16.mxu0 0
    %434 = vmatpush1.bf16.msra.mxu0 0
    %435 = vmatprep.subr.bf16.mxu0 0
    %436 = vmatpush1.bf16.msra.mxu0 0
    %437 = vmatprep.subr.bf16.mxu0 0
    %438 = vmatpush1.bf16.msra.mxu0 0
    %439 = vmatprep.subr.bf16.mxu0 0
    %440 = vmatpush1.bf16.msra.mxu0 0
    %441 = vmatprep.subr.bf16.mxu0 0
    %442 = vmatpush1.bf16.msra.mxu0 0
    %443 = vmatprep.mubr.bf16.mxu0 0
    %444 = vmatmul.mubr.bf16.gmra.mrb[0].mxu0 %v339
    %v445 = vpop.f32.mrb[0].mxu0
    %v446 = vadd.f32 %v361, %v445
    %v447 = vpop.f32.mrb[0].mxu0
    %v448 = vpop.f32.mrb[0].mxu0
    %v449 = vadd.f32 %v361, %v448
    %v450 = vpop.f32.mrb[0].mxu0
    %451 = vdwg.mxu0
    %v452 = vtanh.pop %v446
    %v453 = vtanh.pop %v449
    %v454 = vpack.c.bf16 %v453, %v452
    %v455 = vld [vmem:[#allocation10] sm:$0xf]
    %v456 = vld [vmem:[#allocation10 + $0x4] sm:$0xf]
    %v457 = vld [vmem:[#allocation10 + $0x8] sm:$0xf]
    %v458 = vld [vmem:[#allocation10 + $0xc] sm:$0xf]
    %v459 = vld [vmem:[#allocation10 + $0x10] sm:$0xf]
    %v460 = vld [vmem:[#allocation10 + $0x14] sm:$0xf]
    %v461 = vld [vmem:[#allocation10 + $0x18] sm:$0xf]
    %v462 = vld [vmem:[#allocation10 + $0x1c] sm:$0xf]
    %v463 = vld [vmem:[#allocation10 + $0x20] sm:$0xf]
    %v464 = vld [vmem:[#allocation10 + $0x24] sm:$0xf]
    %v465 = vld [vmem:[#allocation10 + $0x28] sm:$0xf]
    %v466 = vld [vmem:[#allocation10 + $0x2c] sm:$0xf]
    %v467 = vld [vmem:[#allocation10 + $0x30] sm:$0xf]
    %v468 = vld [vmem:[#allocation10 + $0x34] sm:$0xf]
    %v469 = vld [vmem:[#allocation10 + $0x38] sm:$0xf]
    %v470 = vld [vmem:[#allocation10 + $0x3c] sm:$0xf]
    %v471 = vld [vmem:[%s8] sm:$0x1]
    %v473 = vlaneseq
    %v474 = vshrl.u32 %v473, 7
    %v475 = vsub.s32 0, %v474
    %v476 = vrot.slane %v471, %v475
    %v494 = vunpack.c.l.b16 %v455
    %v495 = vunpack.c.l.b16 %v456
    %v496 = vunpack.c.l.b16 %v457
    %v497 = vunpack.c.l.b16 %v458
    %v498 = vunpack.c.l.b16 %v459
    %v499 = vunpack.c.l.b16 %v460
    %v500 = vunpack.c.l.b16 %v461
    %v501 = vunpack.c.l.b16 %v462
    %v502 = vunpack.c.l.b16 %v463
    %v503 = vunpack.c.l.b16 %v464
    %v504 = vunpack.c.l.b16 %v465
    %v505 = vunpack.c.l.b16 %v466
    %v506 = vunpack.c.l.b16 %v467
    %v507 = vunpack.c.l.b16 %v468
    %v508 = vunpack.c.l.b16 %v469
    %v509 = vunpack.c.l.b16 %v470
    %v510 = vpack.c.b16 %v495, %v494
    %v511 = vpack.c.b16 %v497, %v496
    %v512 = vpack.c.b16 %v499, %v498
    %v513 = vpack.c.b16 %v501, %v500
    %v514 = vpack.c.b16 %v503, %v502
    %v515 = vpack.c.b16 %v505, %v504
    %v516 = vpack.c.b16 %v507, %v506
    %v517 = vpack.c.b16 %v509, %v508
    %526 = vmatprep.subr.bf16.mxu0 0
    %527 = vmatpush1.bf16.msra.mxu0 %v510
    %528 = vmatprep.subr.bf16.mxu0 0
    %529 = vmatpush1.bf16.msra.mxu0 %v511
    %530 = vmatprep.subr.bf16.mxu0 0
    %531 = vmatpush1.bf16.msra.mxu0 %v512
    %532 = vmatprep.subr.bf16.mxu0 0
    %533 = vmatpush1.bf16.msra.mxu0 %v513
    %534 = vmatprep.subr.bf16.mxu0 0
    %535 = vmatpush1.bf16.msra.mxu0 %v514
    %536 = vmatprep.subr.bf16.mxu0 0
    %537 = vmatpush1.bf16.msra.mxu0 %v515
    %538 = vmatprep.subr.bf16.mxu0 0
    %539 = vmatpush1.bf16.msra.mxu0 %v516
    %540 = vmatprep.subr.bf16.mxu0 0
    %541 = vmatpush1.bf16.msra.mxu0 %v517
    %542 = vmatprep.subr.bf16.mxu0 0
    %543 = vmatpush1.bf16.msra.mxu0 0
    %544 = vmatprep.subr.bf16.mxu0 0
    %545 = vmatpush1.bf16.msra.mxu0 0
    %546 = vmatprep.subr.bf16.mxu0 0
    %547 = vmatpush1.bf16.msra.mxu0 0
    %548 = vmatprep.subr.bf16.mxu0 0
    %549 = vmatpush1.bf16.msra.mxu0 0
    %550 = vmatprep.subr.bf16.mxu0 0
    %551 = vmatpush1.bf16.msra.mxu0 0
    %552 = vmatprep.subr.bf16.mxu0 0
    %553 = vmatpush1.bf16.msra.mxu0 0
    %554 = vmatprep.subr.bf16.mxu0 0
    %555 = vmatpush1.bf16.msra.mxu0 0
    %556 = vmatprep.subr.bf16.mxu0 0
    %557 = vmatpush1.bf16.msra.mxu0 0
    %558 = vmatprep.mubr.bf16.mxu0 0
    %559 = vmatmul.mubr.bf16.gmra.mrb[0].mxu0 %v454
    %v560 = vpop.f32.mrb[0].mxu0
    %v561 = vadd.f32 %v476, %v560
    %v562 = vpop.f32.mrb[0].mxu0
    %v563 = vpop.f32.mrb[0].mxu0
    %v564 = vadd.f32 %v476, %v563
    %v565 = vpop.f32.mrb[0].mxu0
    %566 = vdwg.mxu0
    %v567 = vpack.c.bf16 %v564, %v561
    %v569 = vunpack.c.l.b16 %v567
    %v570 = vunpack.c.h.b16 %v567
    %v571 = vpack.c.b16 %v569, %v569
    %v572 = vpack.c.b16 %v570, %v570
    %575 = vst [vmem:[#allocation11] sm:$0xf] %v571
    %576 = vst [vmem:[#allocation11 + $0x4] sm:$0xf] %v572
    // Predicated region
    $region58: #{tpu_custom_call.1} parent=1 // pred_check
      _
    $region59: #{tpu_custom_call.1} parent=1 // pred_check_branch
      %578 = sbr.rel (0) target = $region61
    $region60: #{tpu_custom_call.1} parent=1 // pred_region
      %s580 = ssub.s32 128, 128
      %581 = vsyncadd [#allocation4], %s580
      %s582 = sshll.u32 [#allocation11], 4
      %s583 = int_to_ptr.vmem [resolvable:$true] %s582
      %588 = dma.vmem_to_hbm [thread:$0]  %s583, 128, %s9, [#allocation4], 64, 64, 4
    $region61: #{tpu_custom_call.1} parent=1 // pred_fallthru
      _
    // Predicated region
    $region62: #{tpu_custom_call.1} parent=1 // pred_check
      _
    $region63: #{tpu_custom_call.1} parent=1 // pred_check_branch
      %590 = sbr.rel (0) target = $region65
    $region64: #{tpu_custom_call.1} parent=1 // pred_region
      %591 = dma.done [#allocation4], 128
    $region65: #{tpu_custom_call.1} parent=1 // pred_fallthru
      _
    %592 = vsyncpa [#allocation3], 1
    %593 = vsyncpa [#allocation6], 1
    %594 = vsyncpa [#allocation9], 1
    %595 = vsyncpa [#allocation4], 1

</llo_original>
